<compile_context>
chip_gen: v7x
topology: tpu7x:2x2x1
jax: 0.10.0
libtpu: 0.0.40
codegen_flags: <defaults>
</compile_context>

<pallas_src>
import functools

import numpy as np
import jax
import jax.numpy as jnp
from jax import lax
from jax.experimental import pallas as pl
from jax.experimental.pallas import tpu as pltpu

_NQ = 12        # number of accumulated sums / counts
_LANES = 128
_SUB = 16       # rows per inner-loop chunk (1 bf16 vreg / 2 f32 vregs)
_TM_MAX = 1024  # rows per grid block (512 KiB f32 per input per block)


def _num_tensorcores():
  """2 only on v7x (2 TensorCores per chip); 1 on v5e / v6e."""
  try:
    kind = (jax.devices()[0].device_kind or "").lower()
  except Exception:  # pragma: no cover
    return 1
  return 2 if ("v7" in kind or "tpu7" in kind) else 1


def _fusion_loss_kernel(pred_ref, gt_ref, fw_ref, rw_ref, dc_ref, dw_ref,
                        out_ref, *, rows_valid, t_per_core,
                        min_disp, max_disp, c1, c2):
  c = pl.program_id(0)
  t = pl.program_id(1)
  tm = pred_ref.shape[0]
  n_sub = tm // _SUB  # static

  @pl.when(t == 0)
  def _init():
    out_ref[...] = jnp.zeros_like(out_ref)

  # Nominal first global row of this block.  Used only for tail masking, so it
  # deliberately ignores the index_map clamp: fully out-of-range blocks read
  # (redundant) valid data but mask everything to zero.
  row0 = (c * t_per_core + t) * tm
  rem = rows_valid - row0                      # number of real rows here
  row_iota = lax.broadcasted_iota(jnp.int32, (_SUB, _LANES), 0)  # hoisted

  def fold(x):
    # (SUB,128) -> (8,128): cross-vreg VPU adds only (no XLU, no SMEM RMW).
    return x.reshape(_SUB // 8, 8, _LANES).sum(axis=0)

  zero = jnp.float32(0.0)

  def body(i, acc):
    r0 = pl.multiple_of(i * _SUB, _SUB)
    valid = (r0 + row_iota) < rem              # ragged-tail row mask

    pred = pred_ref[pl.ds(r0, _SUB), :]
    gt = gt_ref[pl.ds(r0, _SUB), :]
    fw = fw_ref[pl.ds(r0, _SUB), :].astype(jnp.float32)
    rw = rw_ref[pl.ds(r0, _SUB), :].astype(jnp.float32)
    dc = dc_ref[pl.ds(r0, _SUB), :]
    dw = dw_ref[pl.ds(r0, _SUB), :]

    # Disparity validity mask + smooth-L1 (beta = 1.0).
    mask0 = valid & (gt >= min_disp) & (gt <= max_disp)
    d = pred - gt
    ad = jnp.abs(d)
    sl1 = jnp.where(ad < 1.0, 0.5 * d * d, ad - 0.5)

    # Fusion / reset weight losses use mask & (disp_warp > 0).
    mask = mask0 & (dw > 0.0)
    diff = jnp.abs(dc - gt) - jnp.abs(dw - gt)

    closer1 = mask & (diff < -c1)
    further1 = mask & (diff > c1)
    same1 = mask & (jnp.abs(diff) <= c1)
    closer2 = mask & (diff < -c2)
    further2 = mask & (diff > c2)

    wc_f = 1.0 - fw
    wc_r = 1.0 - rw

    # Compute -> fold -> accumulate one term at a time; everything stays in
    # vregs (12 x (8,128) loop-carried accumulators).
    return (
        acc[0] + fold(jnp.where(mask0, sl1, zero)),       # sum smooth-L1
        acc[1] + fold(mask0.astype(jnp.float32)),          # |mask0|
        acc[2] + fold(jnp.where(closer1, fw, zero)),       # sum fw on closer1
        acc[3] + fold(closer1.astype(jnp.float32)),
        acc[4] + fold(jnp.where(further1, wc_f, zero)),    # sum 1-fw further1
        acc[5] + fold(further1.astype(jnp.float32)),
        acc[6] + fold(jnp.where(same1, jnp.abs(wc_f - 0.5), zero)),
        acc[7] + fold(same1.astype(jnp.float32)),
        acc[8] + fold(jnp.where(closer2, rw, zero)),       # sum rw on closer2
        acc[9] + fold(closer2.astype(jnp.float32)),
        acc[10] + fold(jnp.where(further2, wc_r, zero)),   # sum 1-rw further2
        acc[11] + fold(further2.astype(jnp.float32)),
    )

  init = tuple(jnp.zeros((8, _LANES), jnp.float32) for _ in range(_NQ))
  acc = lax.fori_loop(0, n_sub, body, init,
                      unroll=max(1, min(4, n_sub)))

  for q in range(_NQ):
    out_ref[0, q] += acc[q]


def fusion_loss(pred_disp, gt_disp, fusion_weight, reset_weight,
                disp_curr, disp_warp, idx=0, loss=None, *,
                min_disp=1, max_disp=192, loss_weight=1.0,
                wr_weight=1.0, wf_weight=1.0, tile_rows=_TM_MAX):
  """JAX/Pallas equivalent of FusionLoss.forward (returns the `loss` dict).

  Note: empty mask selections produce 0/0 = NaN (matches torch.mean over an
  empty selection) and the NaN propagates into the returned total loss.
  `loss_weight` must be a static Python/NumPy value.
  """
  if loss is None:
    loss = {}
  key = 'loss_temporal{}'.format(idx)

  # Static host-side check (mirrors torch.any(torch.tensor(loss_weight) > 0)).
  if not bool(np.any(np.asarray(loss_weight) > 0.0)):
    # Same shape/dtype as the normal path (scalar total * loss_weight).
    loss[key] = jnp.zeros(np.shape(loss_weight), jnp.float32)
    return loss

  n = int(np.prod(pred_disp.shape))

  def as_rows(a, dtype, pad_value):
    a = jnp.asarray(a, dtype)
    if n % _LANES == 0:
      return a.reshape(n // _LANES, _LANES)      # free reshape, no HBM copy
    # TODO(synk): a fully pad-free path for numel % 128 != 0 would need a
    # (B*H, W)-shaped kernel variant; this <128-element pad still costs one
    # copy per input.
    flat = a.reshape(-1)
    flat = jnp.pad(flat, (0, (-n) % _LANES), constant_values=pad_value)
    return flat.reshape(-1, _LANES)

  def weight_dtype(a):
    dt = jnp.asarray(a).dtype
    ok = (jnp.dtype(jnp.bfloat16), jnp.dtype(jnp.float32))
    return dt if dt in ok else jnp.dtype(jnp.float32)

  # gt pad value fails mask0, so any padded elements contribute exactly zero.
  args = (as_rows(pred_disp, jnp.float32, 0.0),
          as_rows(gt_disp, jnp.float32, float(min_disp) - 1.0),
          as_rows(fusion_weight, weight_dtype(fusion_weight), 0.0),
          as_rows(reset_weight, weight_dtype(reset_weight), 0.0),
          as_rows(disp_curr, jnp.float32, 0.0),
          as_rows(disp_warp, jnp.float32, 0.0))

  rows = args[0].shape[0]
  ncores = _num_tensorcores()

  # Block rows: multiple of _SUB, at most tile_rows, covering each core's
  # share in as few grid steps as possible.
  per_core_rows = -(-rows // ncores)
  tm = min(int(tile_rows), -(-per_core_rows // _SUB) * _SUB)
  tm = max(_SUB, -(-tm // _SUB) * _SUB)
  blocks_total = -(-rows // tm)
  t_per_core = -(-blocks_total // ncores)
  last_block = blocks_total - 1

  def in_map(c, t):
    # Clamp so a core's trailing (fully out-of-range) blocks re-read the last
    # valid block; the in-kernel row mask zeroes their contribution.
    return (jnp.minimum(c * t_per_core + t, last_block), 0)

  in_spec = pl.BlockSpec((tm, _LANES), in_map)
  out_spec = pl.BlockSpec((1, _NQ, 8, _LANES), lambda c, t: (c, 0, 0, 0))

  kernel = functools.partial(
      _fusion_loss_kernel, rows_valid=rows, t_per_core=t_per_core,
      min_disp=float(min_disp), max_disp=float(max_disp), c1=1.0, c2=5.0)

  if ncores > 1:
    core_sem = getattr(pltpu, "CORE_PARALLEL", "parallel")
    red_sem = getattr(pltpu, "ARBITRARY", "arbitrary")
    semantics = (core_sem, red_sem)
  else:
    semantics = ("arbitrary", "arbitrary")

  bytes_in = sum(int(a.size) * a.dtype.itemsize for a in args)
  cost = pl.CostEstimate(flops=60 * n, transcendentals=0,
                         bytes_accessed=bytes_in + ncores * _NQ * 8 * _LANES * 4)

  partials = pl.pallas_call(
      kernel,
      out_shape=jax.ShapeDtypeStruct((ncores, _NQ, 8, _LANES), jnp.float32),
      grid=(ncores, t_per_core),
      in_specs=[in_spec] * 6,
      out_specs=out_spec,
      compiler_params=pltpu.CompilerParams(
          dimension_semantics=semantics,
          vmem_limit_bytes=32 * 1024 * 1024),
      cost_estimate=cost,
  )(*args)

  sums = jnp.sum(partials, axis=(0, 2, 3))      # (12,) tiny final reduction

  # Final scalar arithmetic (empty selection -> 0/0 = NaN, same as PyTorch).
  disp_loss = sums[0] / sums[1]
  wf_closer = sums[2] / sums[3]
  wf_further = sums[4] / sums[5]
  wf_same = sums[6] / sums[7]
  wr_closer = sums[8] / sums[9]
  wr_further = sums[10] / sums[11]

  total = (disp_loss
           + (wf_closer + wf_further + wf_same * 0.2) * wf_weight
           + (wr_closer + wr_further) * wr_weight)
  loss[key] = total * jnp.asarray(loss_weight, jnp.float32)
  return loss


def _reference_jax(pred, gt, fw, rw, dc, dw, min_disp=1, max_disp=192,
                   loss_weight=1.0, wr_weight=1.0, wf_weight=1.0):
  """Pure-JAX reference mirroring the PyTorch forward."""
  def masked_mean(v, m):
    mf = m.astype(jnp.float32)
    return jnp.sum(v * mf) / jnp.sum(mf)

  mask0 = (gt >= min_disp) & (gt <= max_disp)
  d = pred - gt
  ad = jnp.abs(d)
  sl1 = jnp.where(ad < 1.0, 0.5 * d * d, ad - 0.5)
  disp_loss = masked_mean(sl1, mask0)

  mask = mask0 & (dw > 0)
  diff = jnp.abs(dc - gt) - jnp.abs(dw - gt)
  wf_closer = masked_mean(fw, (diff < -1.0) & mask)
  wf_further = masked_mean(1.0 - fw, (diff > 1.0) & mask)
  wf_same = masked_mean(jnp.abs((1.0 - fw) - 0.5), (jnp.abs(diff) <= 1.0) & mask)
  wr_closer = masked_mean(rw, (diff < -5.0) & mask)
  wr_further = masked_mean(1.0 - rw, (diff > 5.0) & mask)
  total = (disp_loss + (wf_closer + wf_further + wf_same * 0.2) * wf_weight
           + (wr_closer + wr_further) * wr_weight)
  return total * loss_weight


if __name__ == "__main__":
  # [B, H, W] = [2, 17, 128]: numel % 128 == 0 (no pad) but rows = 34 is not a
  # multiple of the block rows, so the in-kernel ragged-tail masking is
  # exercised on both runs below.
  B, H, W = 2, 17, 128
  key = jax.random.PRNGKey(0)
  k = jax.random.split(key, 6)

  gt_disp = jax.random.uniform(k[0], (B, H, W), jnp.float32, 0.0, 200.0)
  pred_disp = gt_disp + jax.random.uniform(k[1], (B, H, W), jnp.float32, -3.0, 3.0)
  disp_curr = gt_disp + jax.random.uniform(k[2], (B, H, W), jnp.float32, -10.0, 10.0)
  disp_warp = gt_disp + jax.random.uniform(k[3], (B, H, W), jnp.float32, -10.0, 10.0)
  # fusion / reset weights supplied as bf16 (kernel upcasts; saves HBM bytes).
  fusion_weight = jax.random.uniform(k[4], (B, H, W), jnp.float32).astype(jnp.bfloat16)
  reset_weight = jax.random.uniform(k[5], (B, H, W), jnp.float32).astype(jnp.bfloat16)

  ref = _reference_jax(pred_disp, gt_disp,
                       fusion_weight.astype(jnp.float32),
                       reset_weight.astype(jnp.float32),
                       disp_curr, disp_warp)

  # Run 1: default (large) tile -> single ragged block per core.
  out1 = fusion_loss(pred_disp, gt_disp, fusion_weight, reset_weight,
                     disp_curr, disp_warp, idx=0, loss={})
  val1 = jax.block_until_ready(out1['loss_temporal0'])
  assert jnp.allclose(val1, ref, rtol=1e-4, atol=1e-5), (val1, ref)

  # Run 2: tiny tile -> multi-step accumulation across the grid + ragged tail.
  out2 = fusion_loss(pred_disp, gt_disp, fusion_weight, reset_weight,
                     disp_curr, disp_warp, idx=0, loss={}, tile_rows=16)
  val2 = jax.block_until_ready(out2['loss_temporal0'])
  assert jnp.allclose(val2, ref, rtol=1e-4, atol=1e-5), (val2, ref)

  print("KERNEL_OK")
</pallas_src>

<mosaic_0001>
module attributes {stable_mosaic.version = 11 : i64} {
  func.func @_fusion_loss_kernel(%arg0: i32, %arg1: i32, %arg2: memref<48x128xf32, #tpu.memory_space<vmem>>, %arg3: memref<48x128xf32, #tpu.memory_space<vmem>>, %arg4: memref<48x128xbf16, #tpu.memory_space<vmem>>, %arg5: memref<48x128xbf16, #tpu.memory_space<vmem>>, %arg6: memref<48x128xf32, #tpu.memory_space<vmem>>, %arg7: memref<48x128xf32, #tpu.memory_space<vmem>>, %arg8: memref<1x12x8x128xf32, #tpu.memory_space<vmem>>) attributes {dimension_semantics = [#tpu.dimension_semantics<arbitrary>, #tpu.dimension_semantics<arbitrary>], iteration_bounds = array<i64: 1, 1>, scalar_prefetch = 0 : i64, scratch_operands = 0 : i64, tpu.core_type = #tpu.core_type<tc>, window_params = [{transform_indices = @transform_0, window_bounds = array<i64: 48, 128>}, {transform_indices = @transform_1, window_bounds = array<i64: 48, 128>}, {transform_indices = @transform_2, window_bounds = array<i64: 48, 128>}, {transform_indices = @transform_3, window_bounds = array<i64: 48, 128>}, {transform_indices = @transform_4, window_bounds = array<i64: 48, 128>}, {transform_indices = @transform_5, window_bounds = array<i64: 48, 128>}, {transform_indices = @transform_6, window_bounds = array<i64: 1, 12, 8, 128>}]} {
    %c0_i32 = arith.constant 0 : i32
    %0 = arith.cmpi eq, %arg1, %c0_i32 : i32
    %1 = arith.extui %0 : i1 to i32
    %c0_i32_0 = arith.constant 0 : i32
    %2 = arith.cmpi ne, %1, %c0_i32_0 : i32
    scf.if %2 {
      %cst_197 = arith.constant 0.000000e+00 : f32
      %473 = vector.broadcast %cst_197 : f32 to vector<1x12x8x128xf32>
      %c0_198 = arith.constant 0 : index
      %c0_199 = arith.constant 0 : index
      %c0_200 = arith.constant 0 : index
      %c0_201 = arith.constant 0 : index
      %474 = vector.load %arg8[%c0_198, %c0_199, %c0_200, %c0_201] : memref<1x12x8x128xf32, #tpu.memory_space<vmem>>, vector<1x12x8x128xf32>
      tpu.vector_store %arg8[%c0_198, %c0_199, %c0_200, %c0_201], %473 {strides = array<i32>} : memref<1x12x8x128xf32, #tpu.memory_space<vmem>>, vector<1x12x8x128xf32>,
    } else {
    }
    %c1_i32 = arith.constant 1 : i32
    %3 = arith.muli %arg0, %c1_i32 : i32
    %4 = arith.addi %3, %arg1 : i32
    %c48_i32 = arith.constant 48 : i32
    %5 = arith.muli %4, %c48_i32 : i32
    %c34_i32 = arith.constant 34 : i32
    %6 = arith.subi %c34_i32, %5 : i32
    %7 = tpu.iota {dimensions = array<i32: 0>} : vector<16x128xi32>
    %cst = arith.constant 0.000000e+00 : f32
    %8 = vector.broadcast %cst : f32 to vector<8x128xf32>
    %cst_1 = arith.constant 0.000000e+00 : f32
    %9 = vector.broadcast %cst_1 : f32 to vector<8x128xf32>
    %cst_2 = arith.constant 0.000000e+00 : f32
    %10 = vector.broadcast %cst_2 : f32 to vector<8x128xf32>
    %cst_3 = arith.constant 0.000000e+00 : f32
    %11 = vector.broadcast %cst_3 : f32 to vector<8x128xf32>
    %cst_4 = arith.constant 0.000000e+00 : f32
    %12 = vector.broadcast %cst_4 : f32 to vector<8x128xf32>
    %cst_5 = arith.constant 0.000000e+00 : f32
    %13 = vector.broadcast %cst_5 : f32 to vector<8x128xf32>
    %cst_6 = arith.constant 0.000000e+00 : f32
    %14 = vector.broadcast %cst_6 : f32 to vector<8x128xf32>
    %cst_7 = arith.constant 0.000000e+00 : f32
    %15 = vector.broadcast %cst_7 : f32 to vector<8x128xf32>
    %cst_8 = arith.constant 0.000000e+00 : f32
    %16 = vector.broadcast %cst_8 : f32 to vector<8x128xf32>
    %cst_9 = arith.constant 0.000000e+00 : f32
    %17 = vector.broadcast %cst_9 : f32 to vector<8x128xf32>
    %cst_10 = arith.constant 0.000000e+00 : f32
    %18 = vector.broadcast %cst_10 : f32 to vector<8x128xf32>
    %cst_11 = arith.constant 0.000000e+00 : f32
    %19 = vector.broadcast %cst_11 : f32 to vector<8x128xf32>
    %cst_12 = arith.constant 0.000000e+00 : f32
    %c0_i32_13 = arith.constant 0 : i32
    %c16_i32 = arith.constant 16 : i32
    %20 = arith.muli %c0_i32_13, %c16_i32 : i32
    %21 = tpu.assume_multiple %20, 16 : i32
    %22 = vector.broadcast %21 : i32 to vector<16x128xi32>
    %23 = arith.addi %22, %7 : vector<16x128xi32>
    %24 = vector.broadcast %6 : i32 to vector<16x128xi32>
    %25 = arith.cmpi slt, %23, %24 : vector<16x128xi32>
    %26 = arith.index_cast %21 : i32 to index
    %c0 = arith.constant 0 : index
    %27 = vector.load %arg2[%26, %c0] : memref<48x128xf32, #tpu.memory_space<vmem>>, vector<16x128xf32>
    %28 = arith.index_cast %21 : i32 to index
    %c0_14 = arith.constant 0 : index
    %29 = vector.load %arg3[%28, %c0_14] : memref<48x128xf32, #tpu.memory_space<vmem>>, vector<16x128xf32>
    %30 = arith.index_cast %21 : i32 to index
    %c0_15 = arith.constant 0 : index
    %31 = vector.load %arg4[%30, %c0_15] : memref<48x128xbf16, #tpu.memory_space<vmem>>, vector<16x128xbf16>
    %32 = arith.extf %31 : vector<16x128xbf16> to vector<16x128xf32>
    %33 = arith.index_cast %21 : i32 to index
    %c0_16 = arith.constant 0 : index
    %34 = vector.load %arg5[%33, %c0_16] : memref<48x128xbf16, #tpu.memory_space<vmem>>, vector<16x128xbf16>
    %35 = arith.extf %34 : vector<16x128xbf16> to vector<16x128xf32>
    %36 = arith.index_cast %21 : i32 to index
    %c0_17 = arith.constant 0 : index
    %37 = vector.load %arg6[%36, %c0_17] : memref<48x128xf32, #tpu.memory_space<vmem>>, vector<16x128xf32>
    %38 = arith.index_cast %21 : i32 to index
    %c0_18 = arith.constant 0 : index
    %39 = vector.load %arg7[%38, %c0_18] : memref<48x128xf32, #tpu.memory_space<vmem>>, vector<16x128xf32>
    %cst_19 = arith.constant 1.000000e+00 : f32
    %40 = vector.broadcast %cst_19 : f32 to vector<16x128xf32>
    %41 = arith.cmpf oge, %29, %40 : vector<16x128xf32>
    %42 = arith.andi %25, %41 : vector<16x128xi1>
    %cst_20 = arith.constant 1.920000e+02 : f32
    %43 = vector.broadcast %cst_20 : f32 to vector<16x128xf32>
    %44 = arith.cmpf ole, %29, %43 : vector<16x128xf32>
    %45 = arith.andi %42, %44 : vector<16x128xi1>
    %46 = arith.subf %27, %29 : vector<16x128xf32>
    %47 = math.absf %46 : vector<16x128xf32>
    %cst_21 = arith.constant 1.000000e+00 : f32
    %48 = vector.broadcast %cst_21 : f32 to vector<16x128xf32>
    %49 = arith.cmpf olt, %47, %48 : vector<16x128xf32>
    %cst_22 = arith.constant 5.000000e-01 : f32
    %50 = vector.broadcast %cst_22 : f32 to vector<16x128xf32>
    %51 = arith.mulf %50, %46 : vector<16x128xf32>
    %52 = arith.mulf %51, %46 : vector<16x128xf32>
    %cst_23 = arith.constant 5.000000e-01 : f32
    %53 = vector.broadcast %cst_23 : f32 to vector<16x128xf32>
    %54 = arith.subf %47, %53 : vector<16x128xf32>
    %55 = arith.select %49, %52, %54 : vector<16x128xi1>, vector<16x128xf32>
    %cst_24 = arith.constant 0.000000e+00 : f32
    %56 = vector.broadcast %cst_24 : f32 to vector<16x128xf32>
    %57 = arith.cmpf ogt, %39, %56 : vector<16x128xf32>
    %58 = arith.andi %45, %57 : vector<16x128xi1>
    %59 = arith.subf %37, %29 : vector<16x128xf32>
    %60 = math.absf %59 : vector<16x128xf32>
    %61 = arith.subf %39, %29 : vector<16x128xf32>
    %62 = math.absf %61 : vector<16x128xf32>
    %63 = arith.subf %60, %62 : vector<16x128xf32>
    %cst_25 = arith.constant -1.000000e+00 : f32
    %64 = vector.broadcast %cst_25 : f32 to vector<16x128xf32>
    %65 = arith.cmpf olt, %63, %64 : vector<16x128xf32>
    %66 = arith.andi %58, %65 : vector<16x128xi1>
    %cst_26 = arith.constant 1.000000e+00 : f32
    %67 = vector.broadcast %cst_26 : f32 to vector<16x128xf32>
    %68 = arith.cmpf ogt, %63, %67 : vector<16x128xf32>
    %69 = arith.andi %58, %68 : vector<16x128xi1>
    %70 = math.absf %63 : vector<16x128xf32>
    %cst_27 = arith.constant 1.000000e+00 : f32
    %71 = vector.broadcast %cst_27 : f32 to vector<16x128xf32>
    %72 = arith.cmpf ole, %70, %71 : vector<16x128xf32>
    %73 = arith.andi %58, %72 : vector<16x128xi1>
    %cst_28 = arith.constant -5.000000e+00 : f32
    %74 = vector.broadcast %cst_28 : f32 to vector<16x128xf32>
    %75 = arith.cmpf olt, %63, %74 : vector<16x128xf32>
    %76 = arith.andi %58, %75 : vector<16x128xi1>
    %cst_29 = arith.constant 5.000000e+00 : f32
    %77 = vector.broadcast %cst_29 : f32 to vector<16x128xf32>
    %78 = arith.cmpf ogt, %63, %77 : vector<16x128xf32>
    %79 = arith.andi %58, %78 : vector<16x128xi1>
    %cst_30 = arith.constant 1.000000e+00 : f32
    %80 = vector.broadcast %cst_30 : f32 to vector<16x128xf32>
    %81 = arith.subf %80, %32 : vector<16x128xf32>
    %cst_31 = arith.constant 1.000000e+00 : f32
    %82 = vector.broadcast %cst_31 : f32 to vector<16x128xf32>
    %83 = arith.subf %82, %35 : vector<16x128xf32>
    %84 = vector.broadcast %cst_12 : f32 to vector<16x128xf32>
    %85 = arith.select %45, %55, %84 : vector<16x128xi1>, vector<16x128xf32>
    %86 = vector.shape_cast %85 : vector<16x128xf32> to vector<2x8x128xf32>
    %cst_32 = arith.constant dense<0.000000e+00> : vector<8x128xf32>
    %87 = vector.multi_reduction <add>, %86, %cst_32 [0] : vector<2x8x128xf32> to vector<8x128xf32>
    %88 = arith.addf %8, %87 : vector<8x128xf32>
    %89 = arith.extui %45 : vector<16x128xi1> to vector<16x128xi32>
    %90 = arith.sitofp %89 : vector<16x128xi32> to vector<16x128xf32>
    %91 = vector.shape_cast %90 : vector<16x128xf32> to vector<2x8x128xf32>
    %cst_33 = arith.constant dense<0.000000e+00> : vector<8x128xf32>
    %92 = vector.multi_reduction <add>, %91, %cst_33 [0] : vector<2x8x128xf32> to vector<8x128xf32>
    %93 = arith.addf %9, %92 : vector<8x128xf32>
    %94 = vector.broadcast %cst_12 : f32 to vector<16x128xf32>
    %95 = arith.select %66, %32, %94 : vector<16x128xi1>, vector<16x128xf32>
    %96 = vector.shape_cast %95 : vector<16x128xf32> to vector<2x8x128xf32>
    %cst_34 = arith.constant dense<0.000000e+00> : vector<8x128xf32>
    %97 = vector.multi_reduction <add>, %96, %cst_34 [0] : vector<2x8x128xf32> to vector<8x128xf32>
    %98 = arith.addf %10, %97 : vector<8x128xf32>
    %99 = arith.extui %66 : vector<16x128xi1> to vector<16x128xi32>
    %100 = arith.sitofp %99 : vector<16x128xi32> to vector<16x128xf32>
    %101 = vector.shape_cast %100 : vector<16x128xf32> to vector<2x8x128xf32>
    %cst_35 = arith.constant dense<0.000000e+00> : vector<8x128xf32>
    %102 = vector.multi_reduction <add>, %101, %cst_35 [0] : vector<2x8x128xf32> to vector<8x128xf32>
    %103 = arith.addf %11, %102 : vector<8x128xf32>
    %104 = vector.broadcast %cst_12 : f32 to vector<16x128xf32>
    %105 = arith.select %69, %81, %104 : vector<16x128xi1>, vector<16x128xf32>
    %106 = vector.shape_cast %105 : vector<16x128xf32> to vector<2x8x128xf32>
    %cst_36 = arith.constant dense<0.000000e+00> : vector<8x128xf32>
    %107 = vector.multi_reduction <add>, %106, %cst_36 [0] : vector<2x8x128xf32> to vector<8x128xf32>
    %108 = arith.addf %12, %107 : vector<8x128xf32>
    %109 = arith.extui %69 : vector<16x128xi1> to vector<16x128xi32>
    %110 = arith.sitofp %109 : vector<16x128xi32> to vector<16x128xf32>
    %111 = vector.shape_cast %110 : vector<16x128xf32> to vector<2x8x128xf32>
    %cst_37 = arith.constant dense<0.000000e+00> : vector<8x128xf32>
    %112 = vector.multi_reduction <add>, %111, %cst_37 [0] : vector<2x8x128xf32> to vector<8x128xf32>
    %113 = arith.addf %13, %112 : vector<8x128xf32>
    %cst_38 = arith.constant 5.000000e-01 : f32
    %114 = vector.broadcast %cst_38 : f32 to vector<16x128xf32>
    %115 = arith.subf %81, %114 : vector<16x128xf32>
    %116 = math.absf %115 : vector<16x128xf32>
    %117 = vector.broadcast %cst_12 : f32 to vector<16x128xf32>
    %118 = arith.select %73, %116, %117 : vector<16x128xi1>, vector<16x128xf32>
    %119 = vector.shape_cast %118 : vector<16x128xf32> to vector<2x8x128xf32>
    %cst_39 = arith.constant dense<0.000000e+00> : vector<8x128xf32>
    %120 = vector.multi_reduction <add>, %119, %cst_39 [0] : vector<2x8x128xf32> to vector<8x128xf32>
    %121 = arith.addf %14, %120 : vector<8x128xf32>
    %122 = arith.extui %73 : vector<16x128xi1> to vector<16x128xi32>
    %123 = arith.sitofp %122 : vector<16x128xi32> to vector<16x128xf32>
    %124 = vector.shape_cast %123 : vector<16x128xf32> to vector<2x8x128xf32>
    %cst_40 = arith.constant dense<0.000000e+00> : vector<8x128xf32>
    %125 = vector.multi_reduction <add>, %124, %cst_40 [0] : vector<2x8x128xf32> to vector<8x128xf32>
    %126 = arith.addf %15, %125 : vector<8x128xf32>
    %127 = vector.broadcast %cst_12 : f32 to vector<16x128xf32>
    %128 = arith.select %76, %35, %127 : vector<16x128xi1>, vector<16x128xf32>
    %129 = vector.shape_cast %128 : vector<16x128xf32> to vector<2x8x128xf32>
    %cst_41 = arith.constant dense<0.000000e+00> : vector<8x128xf32>
    %130 = vector.multi_reduction <add>, %129, %cst_41 [0] : vector<2x8x128xf32> to vector<8x128xf32>
    %131 = arith.addf %16, %130 : vector<8x128xf32>
    %132 = arith.extui %76 : vector<16x128xi1> to vector<16x128xi32>
    %133 = arith.sitofp %132 : vector<16x128xi32> to vector<16x128xf32>
    %134 = vector.shape_cast %133 : vector<16x128xf32> to vector<2x8x128xf32>
    %cst_42 = arith.constant dense<0.000000e+00> : vector<8x128xf32>
    %135 = vector.multi_reduction <add>, %134, %cst_42 [0] : vector<2x8x128xf32> to vector<8x128xf32>
    %136 = arith.addf %17, %135 : vector<8x128xf32>
    %137 = vector.broadcast %cst_12 : f32 to vector<16x128xf32>
    %138 = arith.select %79, %83, %137 : vector<16x128xi1>, vector<16x128xf32>
    %139 = vector.shape_cast %138 : vector<16x128xf32> to vector<2x8x128xf32>
    %cst_43 = arith.constant dense<0.000000e+00> : vector<8x128xf32>
    %140 = vector.multi_reduction <add>, %139, %cst_43 [0] : vector<2x8x128xf32> to vector<8x128xf32>
    %141 = arith.addf %18, %140 : vector<8x128xf32>
    %142 = arith.extui %79 : vector<16x128xi1> to vector<16x128xi32>
    %143 = arith.sitofp %142 : vector<16x128xi32> to vector<16x128xf32>
    %144 = vector.shape_cast %143 : vector<16x128xf32> to vector<2x8x128xf32>
    %cst_44 = arith.constant dense<0.000000e+00> : vector<8x128xf32>
    %145 = vector.multi_reduction <add>, %144, %cst_44 [0] : vector<2x8x128xf32> to vector<8x128xf32>
    %146 = arith.addf %19, %145 : vector<8x128xf32>
    %c1_i32_45 = arith.constant 1 : i32
    %c16_i32_46 = arith.constant 16 : i32
    %147 = arith.muli %c1_i32_45, %c16_i32_46 : i32
    %148 = tpu.assume_multiple %147, 16 : i32
    %149 = vector.broadcast %148 : i32 to vector<16x128xi32>
    %150 = arith.addi %149, %7 : vector<16x128xi32>
    %151 = vector.broadcast %6 : i32 to vector<16x128xi32>
    %152 = arith.cmpi slt, %150, %151 : vector<16x128xi32>
    %153 = arith.index_cast %148 : i32 to index
    %c0_47 = arith.constant 0 : index
    %154 = vector.load %arg2[%153, %c0_47] : memref<48x128xf32, #tpu.memory_space<vmem>>, vector<16x128xf32>
    %155 = arith.index_cast %148 : i32 to index
    %c0_48 = arith.constant 0 : index
    %156 = vector.load %arg3[%155, %c0_48] : memref<48x128xf32, #tpu.memory_space<vmem>>, vector<16x128xf32>
    %157 = arith.index_cast %148 : i32 to index
    %c0_49 = arith.constant 0 : index
    %158 = vector.load %arg4[%157, %c0_49] : memref<48x128xbf16, #tpu.memory_space<vmem>>, vector<16x128xbf16>
    %159 = arith.extf %158 : vector<16x128xbf16> to vector<16x128xf32>
    %160 = arith.index_cast %148 : i32 to index
    %c0_50 = arith.constant 0 : index
    %161 = vector.load %arg5[%160, %c0_50] : memref<48x128xbf16, #tpu.memory_space<vmem>>, vector<16x128xbf16>
    %162 = arith.extf %161 : vector<16x128xbf16> to vector<16x128xf32>
    %163 = arith.index_cast %148 : i32 to index
    %c0_51 = arith.constant 0 : index
    %164 = vector.load %arg6[%163, %c0_51] : memref<48x128xf32, #tpu.memory_space<vmem>>, vector<16x128xf32>
    %165 = arith.index_cast %148 : i32 to index
    %c0_52 = arith.constant 0 : index
    %166 = vector.load %arg7[%165, %c0_52] : memref<48x128xf32, #tpu.memory_space<vmem>>, vector<16x128xf32>
    %cst_53 = arith.constant 1.000000e+00 : f32
    %167 = vector.broadcast %cst_53 : f32 to vector<16x128xf32>
    %168 = arith.cmpf oge, %156, %167 : vector<16x128xf32>
    %169 = arith.andi %152, %168 : vector<16x128xi1>
    %cst_54 = arith.constant 1.920000e+02 : f32
    %170 = vector.broadcast %cst_54 : f32 to vector<16x128xf32>
    %171 = arith.cmpf ole, %156, %170 : vector<16x128xf32>
    %172 = arith.andi %169, %171 : vector<16x128xi1>
    %173 = arith.subf %154, %156 : vector<16x128xf32>
    %174 = math.absf %173 : vector<16x128xf32>
    %cst_55 = arith.constant 1.000000e+00 : f32
    %175 = vector.broadcast %cst_55 : f32 to vector<16x128xf32>
    %176 = arith.cmpf olt, %174, %175 : vector<16x128xf32>
    %cst_56 = arith.constant 5.000000e-01 : f32
    %177 = vector.broadcast %cst_56 : f32 to vector<16x128xf32>
    %178 = arith.mulf %177, %173 : vector<16x128xf32>
    %179 = arith.mulf %178, %173 : vector<16x128xf32>
    %cst_57 = arith.constant 5.000000e-01 : f32
    %180 = vector.broadcast %cst_57 : f32 to vector<16x128xf32>
    %181 = arith.subf %174, %180 : vector<16x128xf32>
    %182 = arith.select %176, %179, %181 : vector<16x128xi1>, vector<16x128xf32>
    %cst_58 = arith.constant 0.000000e+00 : f32
    %183 = vector.broadcast %cst_58 : f32 to vector<16x128xf32>
    %184 = arith.cmpf ogt, %166, %183 : vector<16x128xf32>
    %185 = arith.andi %172, %184 : vector<16x128xi1>
    %186 = arith.subf %164, %156 : vector<16x128xf32>
    %187 = math.absf %186 : vector<16x128xf32>
    %188 = arith.subf %166, %156 : vector<16x128xf32>
    %189 = math.absf %188 : vector<16x128xf32>
    %190 = arith.subf %187, %189 : vector<16x128xf32>
    %cst_59 = arith.constant -1.000000e+00 : f32
    %191 = vector.broadcast %cst_59 : f32 to vector<16x128xf32>
    %192 = arith.cmpf olt, %190, %191 : vector<16x128xf32>
    %193 = arith.andi %185, %192 : vector<16x128xi1>
    %cst_60 = arith.constant 1.000000e+00 : f32
    %194 = vector.broadcast %cst_60 : f32 to vector<16x128xf32>
    %195 = arith.cmpf ogt, %190, %194 : vector<16x128xf32>
    %196 = arith.andi %185, %195 : vector<16x128xi1>
    %197 = math.absf %190 : vector<16x128xf32>
    %cst_61 = arith.constant 1.000000e+00 : f32
    %198 = vector.broadcast %cst_61 : f32 to vector<16x128xf32>
    %199 = arith.cmpf ole, %197, %198 : vector<16x128xf32>
    %200 = arith.andi %185, %199 : vector<16x128xi1>
    %cst_62 = arith.constant -5.000000e+00 : f32
    %201 = vector.broadcast %cst_62 : f32 to vector<16x128xf32>
    %202 = arith.cmpf olt, %190, %201 : vector<16x128xf32>
    %203 = arith.andi %185, %202 : vector<16x128xi1>
    %cst_63 = arith.constant 5.000000e+00 : f32
    %204 = vector.broadcast %cst_63 : f32 to vector<16x128xf32>
    %205 = arith.cmpf ogt, %190, %204 : vector<16x128xf32>
    %206 = arith.andi %185, %205 : vector<16x128xi1>
    %cst_64 = arith.constant 1.000000e+00 : f32
    %207 = vector.broadcast %cst_64 : f32 to vector<16x128xf32>
    %208 = arith.subf %207, %159 : vector<16x128xf32>
    %cst_65 = arith.constant 1.000000e+00 : f32
    %209 = vector.broadcast %cst_65 : f32 to vector<16x128xf32>
    %210 = arith.subf %209, %162 : vector<16x128xf32>
    %211 = vector.broadcast %cst_12 : f32 to vector<16x128xf32>
    %212 = arith.select %172, %182, %211 : vector<16x128xi1>, vector<16x128xf32>
    %213 = vector.shape_cast %212 : vector<16x128xf32> to vector<2x8x128xf32>
    %cst_66 = arith.constant dense<0.000000e+00> : vector<8x128xf32>
    %214 = vector.multi_reduction <add>, %213, %cst_66 [0] : vector<2x8x128xf32> to vector<8x128xf32>
    %215 = arith.addf %88, %214 : vector<8x128xf32>
    %216 = arith.extui %172 : vector<16x128xi1> to vector<16x128xi32>
    %217 = arith.sitofp %216 : vector<16x128xi32> to vector<16x128xf32>
    %218 = vector.shape_cast %217 : vector<16x128xf32> to vector<2x8x128xf32>
    %cst_67 = arith.constant dense<0.000000e+00> : vector<8x128xf32>
    %219 = vector.multi_reduction <add>, %218, %cst_67 [0] : vector<2x8x128xf32> to vector<8x128xf32>
    %220 = arith.addf %93, %219 : vector<8x128xf32>
    %221 = vector.broadcast %cst_12 : f32 to vector<16x128xf32>
    %222 = arith.select %193, %159, %221 : vector<16x128xi1>, vector<16x128xf32>
    %223 = vector.shape_cast %222 : vector<16x128xf32> to vector<2x8x128xf32>
    %cst_68 = arith.constant dense<0.000000e+00> : vector<8x128xf32>
    %224 = vector.multi_reduction <add>, %223, %cst_68 [0] : vector<2x8x128xf32> to vector<8x128xf32>
    %225 = arith.addf %98, %224 : vector<8x128xf32>
    %226 = arith.extui %193 : vector<16x128xi1> to vector<16x128xi32>
    %227 = arith.sitofp %226 : vector<16x128xi32> to vector<16x128xf32>
    %228 = vector.shape_cast %227 : vector<16x128xf32> to vector<2x8x128xf32>
    %cst_69 = arith.constant dense<0.000000e+00> : vector<8x128xf32>
    %229 = vector.multi_reduction <add>, %228, %cst_69 [0] : vector<2x8x128xf32> to vector<8x128xf32>
    %230 = arith.addf %103, %229 : vector<8x128xf32>
    %231 = vector.broadcast %cst_12 : f32 to vector<16x128xf32>
    %232 = arith.select %196, %208, %231 : vector<16x128xi1>, vector<16x128xf32>
    %233 = vector.shape_cast %232 : vector<16x128xf32> to vector<2x8x128xf32>
    %cst_70 = arith.constant dense<0.000000e+00> : vector<8x128xf32>
    %234 = vector.multi_reduction <add>, %233, %cst_70 [0] : vector<2x8x128xf32> to vector<8x128xf32>
    %235 = arith.addf %108, %234 : vector<8x128xf32>
    %236 = arith.extui %196 : vector<16x128xi1> to vector<16x128xi32>
    %237 = arith.sitofp %236 : vector<16x128xi32> to vector<16x128xf32>
    %238 = vector.shape_cast %237 : vector<16x128xf32> to vector<2x8x128xf32>
    %cst_71 = arith.constant dense<0.000000e+00> : vector<8x128xf32>
    %239 = vector.multi_reduction <add>, %238, %cst_71 [0] : vector<2x8x128xf32> to vector<8x128xf32>
    %240 = arith.addf %113, %239 : vector<8x128xf32>
    %cst_72 = arith.constant 5.000000e-01 : f32
    %241 = vector.broadcast %cst_72 : f32 to vector<16x128xf32>
    %242 = arith.subf %208, %241 : vector<16x128xf32>
    %243 = math.absf %242 : vector<16x128xf32>
    %244 = vector.broadcast %cst_12 : f32 to vector<16x128xf32>
    %245 = arith.select %200, %243, %244 : vector<16x128xi1>, vector<16x128xf32>
    %246 = vector.shape_cast %245 : vector<16x128xf32> to vector<2x8x128xf32>
    %cst_73 = arith.constant dense<0.000000e+00> : vector<8x128xf32>
    %247 = vector.multi_reduction <add>, %246, %cst_73 [0] : vector<2x8x128xf32> to vector<8x128xf32>
    %248 = arith.addf %121, %247 : vector<8x128xf32>
    %249 = arith.extui %200 : vector<16x128xi1> to vector<16x128xi32>
    %250 = arith.sitofp %249 : vector<16x128xi32> to vector<16x128xf32>
    %251 = vector.shape_cast %250 : vector<16x128xf32> to vector<2x8x128xf32>
    %cst_74 = arith.constant dense<0.000000e+00> : vector<8x128xf32>
    %252 = vector.multi_reduction <add>, %251, %cst_74 [0] : vector<2x8x128xf32> to vector<8x128xf32>
    %253 = arith.addf %126, %252 : vector<8x128xf32>
    %254 = vector.broadcast %cst_12 : f32 to vector<16x128xf32>
    %255 = arith.select %203, %162, %254 : vector<16x128xi1>, vector<16x128xf32>
    %256 = vector.shape_cast %255 : vector<16x128xf32> to vector<2x8x128xf32>
    %cst_75 = arith.constant dense<0.000000e+00> : vector<8x128xf32>
    %257 = vector.multi_reduction <add>, %256, %cst_75 [0] : vector<2x8x128xf32> to vector<8x128xf32>
    %258 = arith.addf %131, %257 : vector<8x128xf32>
    %259 = arith.extui %203 : vector<16x128xi1> to vector<16x128xi32>
    %260 = arith.sitofp %259 : vector<16x128xi32> to vector<16x128xf32>
    %261 = vector.shape_cast %260 : vector<16x128xf32> to vector<2x8x128xf32>
    %cst_76 = arith.constant dense<0.000000e+00> : vector<8x128xf32>
    %262 = vector.multi_reduction <add>, %261, %cst_76 [0] : vector<2x8x128xf32> to vector<8x128xf32>
    %263 = arith.addf %136, %262 : vector<8x128xf32>
    %264 = vector.broadcast %cst_12 : f32 to vector<16x128xf32>
    %265 = arith.select %206, %210, %264 : vector<16x128xi1>, vector<16x128xf32>
    %266 = vector.shape_cast %265 : vector<16x128xf32> to vector<2x8x128xf32>
    %cst_77 = arith.constant dense<0.000000e+00> : vector<8x128xf32>
    %267 = vector.multi_reduction <add>, %266, %cst_77 [0] : vector<2x8x128xf32> to vector<8x128xf32>
    %268 = arith.addf %141, %267 : vector<8x128xf32>
    %269 = arith.extui %206 : vector<16x128xi1> to vector<16x128xi32>
    %270 = arith.sitofp %269 : vector<16x128xi32> to vector<16x128xf32>
    %271 = vector.shape_cast %270 : vector<16x128xf32> to vector<2x8x128xf32>
    %cst_78 = arith.constant dense<0.000000e+00> : vector<8x128xf32>
    %272 = vector.multi_reduction <add>, %271, %cst_78 [0] : vector<2x8x128xf32> to vector<8x128xf32>
    %273 = arith.addf %146, %272 : vector<8x128xf32>
    %c2_i32 = arith.constant 2 : i32
    %c16_i32_79 = arith.constant 16 : i32
    %274 = arith.muli %c2_i32, %c16_i32_79 : i32
    %275 = tpu.assume_multiple %274, 16 : i32
    %276 = vector.broadcast %275 : i32 to vector<16x128xi32>
    %277 = arith.addi %276, %7 : vector<16x128xi32>
    %278 = vector.broadcast %6 : i32 to vector<16x128xi32>
    %279 = arith.cmpi slt, %277, %278 : vector<16x128xi32>
    %280 = arith.index_cast %275 : i32 to index
    %c0_80 = arith.constant 0 : index
    %281 = vector.load %arg2[%280, %c0_80] : memref<48x128xf32, #tpu.memory_space<vmem>>, vector<16x128xf32>
    %282 = arith.index_cast %275 : i32 to index
    %c0_81 = arith.constant 0 : index
    %283 = vector.load %arg3[%282, %c0_81] : memref<48x128xf32, #tpu.memory_space<vmem>>, vector<16x128xf32>
    %284 = arith.index_cast %275 : i32 to index
    %c0_82 = arith.constant 0 : index
    %285 = vector.load %arg4[%284, %c0_82] : memref<48x128xbf16, #tpu.memory_space<vmem>>, vector<16x128xbf16>
    %286 = arith.extf %285 : vector<16x128xbf16> to vector<16x128xf32>
    %287 = arith.index_cast %275 : i32 to index
    %c0_83 = arith.constant 0 : index
    %288 = vector.load %arg5[%287, %c0_83] : memref<48x128xbf16, #tpu.memory_space<vmem>>, vector<16x128xbf16>
    %289 = arith.extf %288 : vector<16x128xbf16> to vector<16x128xf32>
    %290 = arith.index_cast %275 : i32 to index
    %c0_84 = arith.constant 0 : index
    %291 = vector.load %arg6[%290, %c0_84] : memref<48x128xf32, #tpu.memory_space<vmem>>, vector<16x128xf32>
    %292 = arith.index_cast %275 : i32 to index
    %c0_85 = arith.constant 0 : index
    %293 = vector.load %arg7[%292, %c0_85] : memref<48x128xf32, #tpu.memory_space<vmem>>, vector<16x128xf32>
    %cst_86 = arith.constant 1.000000e+00 : f32
    %294 = vector.broadcast %cst_86 : f32 to vector<16x128xf32>
    %295 = arith.cmpf oge, %283, %294 : vector<16x128xf32>
    %296 = arith.andi %279, %295 : vector<16x128xi1>
    %cst_87 = arith.constant 1.920000e+02 : f32
    %297 = vector.broadcast %cst_87 : f32 to vector<16x128xf32>
    %298 = arith.cmpf ole, %283, %297 : vector<16x128xf32>
    %299 = arith.andi %296, %298 : vector<16x128xi1>
    %300 = arith.subf %281, %283 : vector<16x128xf32>
    %301 = math.absf %300 : vector<16x128xf32>
    %cst_88 = arith.constant 1.000000e+00 : f32
    %302 = vector.broadcast %cst_88 : f32 to vector<16x128xf32>
    %303 = arith.cmpf olt, %301, %302 : vector<16x128xf32>
    %cst_89 = arith.constant 5.000000e-01 : f32
    %304 = vector.broadcast %cst_89 : f32 to vector<16x128xf32>
    %305 = arith.mulf %304, %300 : vector<16x128xf32>
    %306 = arith.mulf %305, %300 : vector<16x128xf32>
    %cst_90 = arith.constant 5.000000e-01 : f32
    %307 = vector.broadcast %cst_90 : f32 to vector<16x128xf32>
    %308 = arith.subf %301, %307 : vector<16x128xf32>
    %309 = arith.select %303, %306, %308 : vector<16x128xi1>, vector<16x128xf32>
    %cst_91 = arith.constant 0.000000e+00 : f32
    %310 = vector.broadcast %cst_91 : f32 to vector<16x128xf32>
    %311 = arith.cmpf ogt, %293, %310 : vector<16x128xf32>
    %312 = arith.andi %299, %311 : vector<16x128xi1>
    %313 = arith.subf %291, %283 : vector<16x128xf32>
    %314 = math.absf %313 : vector<16x128xf32>
    %315 = arith.subf %293, %283 : vector<16x128xf32>
    %316 = math.absf %315 : vector<16x128xf32>
    %317 = arith.subf %314, %316 : vector<16x128xf32>
    %cst_92 = arith.constant -1.000000e+00 : f32
    %318 = vector.broadcast %cst_92 : f32 to vector<16x128xf32>
    %319 = arith.cmpf olt, %317, %318 : vector<16x128xf32>
    %320 = arith.andi %312, %319 : vector<16x128xi1>
    %cst_93 = arith.constant 1.000000e+00 : f32
    %321 = vector.broadcast %cst_93 : f32 to vector<16x128xf32>
    %322 = arith.cmpf ogt, %317, %321 : vector<16x128xf32>
    %323 = arith.andi %312, %322 : vector<16x128xi1>
    %324 = math.absf %317 : vector<16x128xf32>
    %cst_94 = arith.constant 1.000000e+00 : f32
    %325 = vector.broadcast %cst_94 : f32 to vector<16x128xf32>
    %326 = arith.cmpf ole, %324, %325 : vector<16x128xf32>
    %327 = arith.andi %312, %326 : vector<16x128xi1>
    %cst_95 = arith.constant -5.000000e+00 : f32
    %328 = vector.broadcast %cst_95 : f32 to vector<16x128xf32>
    %329 = arith.cmpf olt, %317, %328 : vector<16x128xf32>
    %330 = arith.andi %312, %329 : vector<16x128xi1>
    %cst_96 = arith.constant 5.000000e+00 : f32
    %331 = vector.broadcast %cst_96 : f32 to vector<16x128xf32>
    %332 = arith.cmpf ogt, %317, %331 : vector<16x128xf32>
    %333 = arith.andi %312, %332 : vector<16x128xi1>
    %cst_97 = arith.constant 1.000000e+00 : f32
    %334 = vector.broadcast %cst_97 : f32 to vector<16x128xf32>
    %335 = arith.subf %334, %286 : vector<16x128xf32>
    %cst_98 = arith.constant 1.000000e+00 : f32
    %336 = vector.broadcast %cst_98 : f32 to vector<16x128xf32>
    %337 = arith.subf %336, %289 : vector<16x128xf32>
    %338 = vector.broadcast %cst_12 : f32 to vector<16x128xf32>
    %339 = arith.select %299, %309, %338 : vector<16x128xi1>, vector<16x128xf32>
    %340 = vector.shape_cast %339 : vector<16x128xf32> to vector<2x8x128xf32>
    %cst_99 = arith.constant dense<0.000000e+00> : vector<8x128xf32>
    %341 = vector.multi_reduction <add>, %340, %cst_99 [0] : vector<2x8x128xf32> to vector<8x128xf32>
    %342 = arith.addf %215, %341 : vector<8x128xf32>
    %343 = arith.extui %299 : vector<16x128xi1> to vector<16x128xi32>
    %344 = arith.sitofp %343 : vector<16x128xi32> to vector<16x128xf32>
    %345 = vector.shape_cast %344 : vector<16x128xf32> to vector<2x8x128xf32>
    %cst_100 = arith.constant dense<0.000000e+00> : vector<8x128xf32>
    %346 = vector.multi_reduction <add>, %345, %cst_100 [0] : vector<2x8x128xf32> to vector<8x128xf32>
    %347 = arith.addf %220, %346 : vector<8x128xf32>
    %348 = vector.broadcast %cst_12 : f32 to vector<16x128xf32>
    %349 = arith.select %320, %286, %348 : vector<16x128xi1>, vector<16x128xf32>
    %350 = vector.shape_cast %349 : vector<16x128xf32> to vector<2x8x128xf32>
    %cst_101 = arith.constant dense<0.000000e+00> : vector<8x128xf32>
    %351 = vector.multi_reduction <add>, %350, %cst_101 [0] : vector<2x8x128xf32> to vector<8x128xf32>
    %352 = arith.addf %225, %351 : vector<8x128xf32>
    %353 = arith.extui %320 : vector<16x128xi1> to vector<16x128xi32>
    %354 = arith.sitofp %353 : vector<16x128xi32> to vector<16x128xf32>
    %355 = vector.shape_cast %354 : vector<16x128xf32> to vector<2x8x128xf32>
    %cst_102 = arith.constant dense<0.000000e+00> : vector<8x128xf32>
    %356 = vector.multi_reduction <add>, %355, %cst_102 [0] : vector<2x8x128xf32> to vector<8x128xf32>
    %357 = arith.addf %230, %356 : vector<8x128xf32>
    %358 = vector.broadcast %cst_12 : f32 to vector<16x128xf32>
    %359 = arith.select %323, %335, %358 : vector<16x128xi1>, vector<16x128xf32>
    %360 = vector.shape_cast %359 : vector<16x128xf32> to vector<2x8x128xf32>
    %cst_103 = arith.constant dense<0.000000e+00> : vector<8x128xf32>
    %361 = vector.multi_reduction <add>, %360, %cst_103 [0] : vector<2x8x128xf32> to vector<8x128xf32>
    %362 = arith.addf %235, %361 : vector<8x128xf32>
    %363 = arith.extui %323 : vector<16x128xi1> to vector<16x128xi32>
    %364 = arith.sitofp %363 : vector<16x128xi32> to vector<16x128xf32>
    %365 = vector.shape_cast %364 : vector<16x128xf32> to vector<2x8x128xf32>
    %cst_104 = arith.constant dense<0.000000e+00> : vector<8x128xf32>
    %366 = vector.multi_reduction <add>, %365, %cst_104 [0] : vector<2x8x128xf32> to vector<8x128xf32>
    %367 = arith.addf %240, %366 : vector<8x128xf32>
    %cst_105 = arith.constant 5.000000e-01 : f32
    %368 = vector.broadcast %cst_105 : f32 to vector<16x128xf32>
    %369 = arith.subf %335, %368 : vector<16x128xf32>
    %370 = math.absf %369 : vector<16x128xf32>
    %371 = vector.broadcast %cst_12 : f32 to vector<16x128xf32>
    %372 = arith.select %327, %370, %371 : vector<16x128xi1>, vector<16x128xf32>
    %373 = vector.shape_cast %372 : vector<16x128xf32> to vector<2x8x128xf32>
    %cst_106 = arith.constant dense<0.000000e+00> : vector<8x128xf32>
    %374 = vector.multi_reduction <add>, %373, %cst_106 [0] : vector<2x8x128xf32> to vector<8x128xf32>
    %375 = arith.addf %248, %374 : vector<8x128xf32>
    %376 = arith.extui %327 : vector<16x128xi1> to vector<16x128xi32>
    %377 = arith.sitofp %376 : vector<16x128xi32> to vector<16x128xf32>
    %378 = vector.shape_cast %377 : vector<16x128xf32> to vector<2x8x128xf32>
    %cst_107 = arith.constant dense<0.000000e+00> : vector<8x128xf32>
    %379 = vector.multi_reduction <add>, %378, %cst_107 [0] : vector<2x8x128xf32> to vector<8x128xf32>
    %380 = arith.addf %253, %379 : vector<8x128xf32>
    %381 = vector.broadcast %cst_12 : f32 to vector<16x128xf32>
    %382 = arith.select %330, %289, %381 : vector<16x128xi1>, vector<16x128xf32>
    %383 = vector.shape_cast %382 : vector<16x128xf32> to vector<2x8x128xf32>
    %cst_108 = arith.constant dense<0.000000e+00> : vector<8x128xf32>
    %384 = vector.multi_reduction <add>, %383, %cst_108 [0] : vector<2x8x128xf32> to vector<8x128xf32>
    %385 = arith.addf %258, %384 : vector<8x128xf32>
    %386 = arith.extui %330 : vector<16x128xi1> to vector<16x128xi32>
    %387 = arith.sitofp %386 : vector<16x128xi32> to vector<16x128xf32>
    %388 = vector.shape_cast %387 : vector<16x128xf32> to vector<2x8x128xf32>
    %cst_109 = arith.constant dense<0.000000e+00> : vector<8x128xf32>
    %389 = vector.multi_reduction <add>, %388, %cst_109 [0] : vector<2x8x128xf32> to vector<8x128xf32>
    %390 = arith.addf %263, %389 : vector<8x128xf32>
    %391 = vector.broadcast %cst_12 : f32 to vector<16x128xf32>
    %392 = arith.select %333, %337, %391 : vector<16x128xi1>, vector<16x128xf32>
    %393 = vector.shape_cast %392 : vector<16x128xf32> to vector<2x8x128xf32>
    %cst_110 = arith.constant dense<0.000000e+00> : vector<8x128xf32>
    %394 = vector.multi_reduction <add>, %393, %cst_110 [0] : vector<2x8x128xf32> to vector<8x128xf32>
    %395 = arith.addf %268, %394 : vector<8x128xf32>
    %396 = arith.extui %333 : vector<16x128xi1> to vector<16x128xi32>
    %397 = arith.sitofp %396 : vector<16x128xi32> to vector<16x128xf32>
    %398 = vector.shape_cast %397 : vector<16x128xf32> to vector<2x8x128xf32>
    %cst_111 = arith.constant dense<0.000000e+00> : vector<8x128xf32>
    %399 = vector.multi_reduction <add>, %398, %cst_111 [0] : vector<2x8x128xf32> to vector<8x128xf32>
    %400 = arith.addf %273, %399 : vector<8x128xf32>
    %c3_i32 = arith.constant 3 : i32
    %c0_112 = arith.constant 0 : index
    %c0_113 = arith.constant 0 : index
    %c0_114 = arith.constant 0 : index
    %c0_115 = arith.constant 0 : index
    %401 = vector.load %arg8[%c0_112, %c0_113, %c0_114, %c0_115] : memref<1x12x8x128xf32, #tpu.memory_space<vmem>>, vector<1x1x8x128xf32>
    %402 = vector.shape_cast %401 : vector<1x1x8x128xf32> to vector<8x128xf32>
    %403 = arith.addf %402, %342 : vector<8x128xf32>
    %c0_116 = arith.constant 0 : index
    %c0_117 = arith.constant 0 : index
    %c0_118 = arith.constant 0 : index
    %c0_119 = arith.constant 0 : index
    %404 = vector.load %arg8[%c0_116, %c0_117, %c0_118, %c0_119] : memref<1x12x8x128xf32, #tpu.memory_space<vmem>>, vector<1x1x8x128xf32>
    %405 = vector.shape_cast %404 : vector<1x1x8x128xf32> to vector<8x128xf32>
    %406 = vector.shape_cast %403 : vector<8x128xf32> to vector<1x1x8x128xf32>
    tpu.vector_store %arg8[%c0_116, %c0_117, %c0_118, %c0_119], %406 {strides = array<i32>} : memref<1x12x8x128xf32, #tpu.memory_space<vmem>>, vector<1x1x8x128xf32>,
    %c0_120 = arith.constant 0 : index
    %c1 = arith.constant 1 : index
    %c0_121 = arith.constant 0 : index
    %c0_122 = arith.constant 0 : index
    %407 = vector.load %arg8[%c0_120, %c1, %c0_121, %c0_122] : memref<1x12x8x128xf32, #tpu.memory_space<vmem>>, vector<1x1x8x128xf32>
    %408 = vector.shape_cast %407 : vector<1x1x8x128xf32> to vector<8x128xf32>
    %409 = arith.addf %408, %347 : vector<8x128xf32>
    %c0_123 = arith.constant 0 : index
    %c1_124 = arith.constant 1 : index
    %c0_125 = arith.constant 0 : index
    %c0_126 = arith.constant 0 : index
    %410 = vector.load %arg8[%c0_123, %c1_124, %c0_125, %c0_126] : memref<1x12x8x128xf32, #tpu.memory_space<vmem>>, vector<1x1x8x128xf32>
    %411 = vector.shape_cast %410 : vector<1x1x8x128xf32> to vector<8x128xf32>
    %412 = vector.shape_cast %409 : vector<8x128xf32> to vector<1x1x8x128xf32>
    tpu.vector_store %arg8[%c0_123, %c1_124, %c0_125, %c0_126], %412 {strides = array<i32>} : memref<1x12x8x128xf32, #tpu.memory_space<vmem>>, vector<1x1x8x128xf32>,
    %c0_127 = arith.constant 0 : index
    %c2 = arith.constant 2 : index
    %c0_128 = arith.constant 0 : index
    %c0_129 = arith.constant 0 : index
    %413 = vector.load %arg8[%c0_127, %c2, %c0_128, %c0_129] : memref<1x12x8x128xf32, #tpu.memory_space<vmem>>, vector<1x1x8x128xf32>
    %414 = vector.shape_cast %413 : vector<1x1x8x128xf32> to vector<8x128xf32>
    %415 = arith.addf %414, %352 : vector<8x128xf32>
    %c0_130 = arith.constant 0 : index
    %c2_131 = arith.constant 2 : index
    %c0_132 = arith.constant 0 : index
    %c0_133 = arith.constant 0 : index
    %416 = vector.load %arg8[%c0_130, %c2_131, %c0_132, %c0_133] : memref<1x12x8x128xf32, #tpu.memory_space<vmem>>, vector<1x1x8x128xf32>
    %417 = vector.shape_cast %416 : vector<1x1x8x128xf32> to vector<8x128xf32>
    %418 = vector.shape_cast %415 : vector<8x128xf32> to vector<1x1x8x128xf32>
    tpu.vector_store %arg8[%c0_130, %c2_131, %c0_132, %c0_133], %418 {strides = array<i32>} : memref<1x12x8x128xf32, #tpu.memory_space<vmem>>, vector<1x1x8x128xf32>,
    %c0_134 = arith.constant 0 : index
    %c3 = arith.constant 3 : index
    %c0_135 = arith.constant 0 : index
    %c0_136 = arith.constant 0 : index
    %419 = vector.load %arg8[%c0_134, %c3, %c0_135, %c0_136] : memref<1x12x8x128xf32, #tpu.memory_space<vmem>>, vector<1x1x8x128xf32>
    %420 = vector.shape_cast %419 : vector<1x1x8x128xf32> to vector<8x128xf32>
    %421 = arith.addf %420, %357 : vector<8x128xf32>
    %c0_137 = arith.constant 0 : index
    %c3_138 = arith.constant 3 : index
    %c0_139 = arith.constant 0 : index
    %c0_140 = arith.constant 0 : index
    %422 = vector.load %arg8[%c0_137, %c3_138, %c0_139, %c0_140] : memref<1x12x8x128xf32, #tpu.memory_space<vmem>>, vector<1x1x8x128xf32>
    %423 = vector.shape_cast %422 : vector<1x1x8x128xf32> to vector<8x128xf32>
    %424 = vector.shape_cast %421 : vector<8x128xf32> to vector<1x1x8x128xf32>
    tpu.vector_store %arg8[%c0_137, %c3_138, %c0_139, %c0_140], %424 {strides = array<i32>} : memref<1x12x8x128xf32, #tpu.memory_space<vmem>>, vector<1x1x8x128xf32>,
    %c0_141 = arith.constant 0 : index
    %c4 = arith.constant 4 : index
    %c0_142 = arith.constant 0 : index
    %c0_143 = arith.constant 0 : index
    %425 = vector.load %arg8[%c0_141, %c4, %c0_142, %c0_143] : memref<1x12x8x128xf32, #tpu.memory_space<vmem>>, vector<1x1x8x128xf32>
    %426 = vector.shape_cast %425 : vector<1x1x8x128xf32> to vector<8x128xf32>
    %427 = arith.addf %426, %362 : vector<8x128xf32>
    %c0_144 = arith.constant 0 : index
    %c4_145 = arith.constant 4 : index
    %c0_146 = arith.constant 0 : index
    %c0_147 = arith.constant 0 : index
    %428 = vector.load %arg8[%c0_144, %c4_145, %c0_146, %c0_147] : memref<1x12x8x128xf32, #tpu.memory_space<vmem>>, vector<1x1x8x128xf32>
    %429 = vector.shape_cast %428 : vector<1x1x8x128xf32> to vector<8x128xf32>
    %430 = vector.shape_cast %427 : vector<8x128xf32> to vector<1x1x8x128xf32>
    tpu.vector_store %arg8[%c0_144, %c4_145, %c0_146, %c0_147], %430 {strides = array<i32>} : memref<1x12x8x128xf32, #tpu.memory_space<vmem>>, vector<1x1x8x128xf32>,
    %c0_148 = arith.constant 0 : index
    %c5 = arith.constant 5 : index
    %c0_149 = arith.constant 0 : index
    %c0_150 = arith.constant 0 : index
    %431 = vector.load %arg8[%c0_148, %c5, %c0_149, %c0_150] : memref<1x12x8x128xf32, #tpu.memory_space<vmem>>, vector<1x1x8x128xf32>
    %432 = vector.shape_cast %431 : vector<1x1x8x128xf32> to vector<8x128xf32>
    %433 = arith.addf %432, %367 : vector<8x128xf32>
    %c0_151 = arith.constant 0 : index
    %c5_152 = arith.constant 5 : index
    %c0_153 = arith.constant 0 : index
    %c0_154 = arith.constant 0 : index
    %434 = vector.load %arg8[%c0_151, %c5_152, %c0_153, %c0_154] : memref<1x12x8x128xf32, #tpu.memory_space<vmem>>, vector<1x1x8x128xf32>
    %435 = vector.shape_cast %434 : vector<1x1x8x128xf32> to vector<8x128xf32>
    %436 = vector.shape_cast %433 : vector<8x128xf32> to vector<1x1x8x128xf32>
    tpu.vector_store %arg8[%c0_151, %c5_152, %c0_153, %c0_154], %436 {strides = array<i32>} : memref<1x12x8x128xf32, #tpu.memory_space<vmem>>, vector<1x1x8x128xf32>,
    %c0_155 = arith.constant 0 : index
    %c6 = arith.constant 6 : index
    %c0_156 = arith.constant 0 : index
    %c0_157 = arith.constant 0 : index
    %437 = vector.load %arg8[%c0_155, %c6, %c0_156, %c0_157] : memref<1x12x8x128xf32, #tpu.memory_space<vmem>>, vector<1x1x8x128xf32>
    %438 = vector.shape_cast %437 : vector<1x1x8x128xf32> to vector<8x128xf32>
    %439 = arith.addf %438, %375 : vector<8x128xf32>
    %c0_158 = arith.constant 0 : index
    %c6_159 = arith.constant 6 : index
    %c0_160 = arith.constant 0 : index
    %c0_161 = arith.constant 0 : index
    %440 = vector.load %arg8[%c0_158, %c6_159, %c0_160, %c0_161] : memref<1x12x8x128xf32, #tpu.memory_space<vmem>>, vector<1x1x8x128xf32>
    %441 = vector.shape_cast %440 : vector<1x1x8x128xf32> to vector<8x128xf32>
    %442 = vector.shape_cast %439 : vector<8x128xf32> to vector<1x1x8x128xf32>
    tpu.vector_store %arg8[%c0_158, %c6_159, %c0_160, %c0_161], %442 {strides = array<i32>} : memref<1x12x8x128xf32, #tpu.memory_space<vmem>>, vector<1x1x8x128xf32>,
    %c0_162 = arith.constant 0 : index
    %c7 = arith.constant 7 : index
    %c0_163 = arith.constant 0 : index
    %c0_164 = arith.constant 0 : index
    %443 = vector.load %arg8[%c0_162, %c7, %c0_163, %c0_164] : memref<1x12x8x128xf32, #tpu.memory_space<vmem>>, vector<1x1x8x128xf32>
    %444 = vector.shape_cast %443 : vector<1x1x8x128xf32> to vector<8x128xf32>
    %445 = arith.addf %444, %380 : vector<8x128xf32>
    %c0_165 = arith.constant 0 : index
    %c7_166 = arith.constant 7 : index
    %c0_167 = arith.constant 0 : index
    %c0_168 = arith.constant 0 : index
    %446 = vector.load %arg8[%c0_165, %c7_166, %c0_167, %c0_168] : memref<1x12x8x128xf32, #tpu.memory_space<vmem>>, vector<1x1x8x128xf32>
    %447 = vector.shape_cast %446 : vector<1x1x8x128xf32> to vector<8x128xf32>
    %448 = vector.shape_cast %445 : vector<8x128xf32> to vector<1x1x8x128xf32>
    tpu.vector_store %arg8[%c0_165, %c7_166, %c0_167, %c0_168], %448 {strides = array<i32>} : memref<1x12x8x128xf32, #tpu.memory_space<vmem>>, vector<1x1x8x128xf32>,
    %c0_169 = arith.constant 0 : index
    %c8 = arith.constant 8 : index
    %c0_170 = arith.constant 0 : index
    %c0_171 = arith.constant 0 : index
    %449 = vector.load %arg8[%c0_169, %c8, %c0_170, %c0_171] : memref<1x12x8x128xf32, #tpu.memory_space<vmem>>, vector<1x1x8x128xf32>
    %450 = vector.shape_cast %449 : vector<1x1x8x128xf32> to vector<8x128xf32>
    %451 = arith.addf %450, %385 : vector<8x128xf32>
    %c0_172 = arith.constant 0 : index
    %c8_173 = arith.constant 8 : index
    %c0_174 = arith.constant 0 : index
    %c0_175 = arith.constant 0 : index
    %452 = vector.load %arg8[%c0_172, %c8_173, %c0_174, %c0_175] : memref<1x12x8x128xf32, #tpu.memory_space<vmem>>, vector<1x1x8x128xf32>
    %453 = vector.shape_cast %452 : vector<1x1x8x128xf32> to vector<8x128xf32>
    %454 = vector.shape_cast %451 : vector<8x128xf32> to vector<1x1x8x128xf32>
    tpu.vector_store %arg8[%c0_172, %c8_173, %c0_174, %c0_175], %454 {strides = array<i32>} : memref<1x12x8x128xf32, #tpu.memory_space<vmem>>, vector<1x1x8x128xf32>,
    %c0_176 = arith.constant 0 : index
    %c9 = arith.constant 9 : index
    %c0_177 = arith.constant 0 : index
    %c0_178 = arith.constant 0 : index
    %455 = vector.load %arg8[%c0_176, %c9, %c0_177, %c0_178] : memref<1x12x8x128xf32, #tpu.memory_space<vmem>>, vector<1x1x8x128xf32>
    %456 = vector.shape_cast %455 : vector<1x1x8x128xf32> to vector<8x128xf32>
    %457 = arith.addf %456, %390 : vector<8x128xf32>
    %c0_179 = arith.constant 0 : index
    %c9_180 = arith.constant 9 : index
    %c0_181 = arith.constant 0 : index
    %c0_182 = arith.constant 0 : index
    %458 = vector.load %arg8[%c0_179, %c9_180, %c0_181, %c0_182] : memref<1x12x8x128xf32, #tpu.memory_space<vmem>>, vector<1x1x8x128xf32>
    %459 = vector.shape_cast %458 : vector<1x1x8x128xf32> to vector<8x128xf32>
    %460 = vector.shape_cast %457 : vector<8x128xf32> to vector<1x1x8x128xf32>
    tpu.vector_store %arg8[%c0_179, %c9_180, %c0_181, %c0_182], %460 {strides = array<i32>} : memref<1x12x8x128xf32, #tpu.memory_space<vmem>>, vector<1x1x8x128xf32>,
    %c0_183 = arith.constant 0 : index
    %c10 = arith.constant 10 : index
    %c0_184 = arith.constant 0 : index
    %c0_185 = arith.constant 0 : index
    %461 = vector.load %arg8[%c0_183, %c10, %c0_184, %c0_185] : memref<1x12x8x128xf32, #tpu.memory_space<vmem>>, vector<1x1x8x128xf32>
    %462 = vector.shape_cast %461 : vector<1x1x8x128xf32> to vector<8x128xf32>
    %463 = arith.addf %462, %395 : vector<8x128xf32>
    %c0_186 = arith.constant 0 : index
    %c10_187 = arith.constant 10 : index
    %c0_188 = arith.constant 0 : index
    %c0_189 = arith.constant 0 : index
    %464 = vector.load %arg8[%c0_186, %c10_187, %c0_188, %c0_189] : memref<1x12x8x128xf32, #tpu.memory_space<vmem>>, vector<1x1x8x128xf32>
    %465 = vector.shape_cast %464 : vector<1x1x8x128xf32> to vector<8x128xf32>
    %466 = vector.shape_cast %463 : vector<8x128xf32> to vector<1x1x8x128xf32>
    tpu.vector_store %arg8[%c0_186, %c10_187, %c0_188, %c0_189], %466 {strides = array<i32>} : memref<1x12x8x128xf32, #tpu.memory_space<vmem>>, vector<1x1x8x128xf32>,
    %c0_190 = arith.constant 0 : index
    %c11 = arith.constant 11 : index
    %c0_191 = arith.constant 0 : index
    %c0_192 = arith.constant 0 : index
    %467 = vector.load %arg8[%c0_190, %c11, %c0_191, %c0_192] : memref<1x12x8x128xf32, #tpu.memory_space<vmem>>, vector<1x1x8x128xf32>
    %468 = vector.shape_cast %467 : vector<1x1x8x128xf32> to vector<8x128xf32>
    %469 = arith.addf %468, %400 : vector<8x128xf32>
    %c0_193 = arith.constant 0 : index
    %c11_194 = arith.constant 11 : index
    %c0_195 = arith.constant 0 : index
    %c0_196 = arith.constant 0 : index
    %470 = vector.load %arg8[%c0_193, %c11_194, %c0_195, %c0_196] : memref<1x12x8x128xf32, #tpu.memory_space<vmem>>, vector<1x1x8x128xf32>
    %471 = vector.shape_cast %470 : vector<1x1x8x128xf32> to vector<8x128xf32>
    %472 = vector.shape_cast %469 : vector<8x128xf32> to vector<1x1x8x128xf32>
    tpu.vector_store %arg8[%c0_193, %c11_194, %c0_195, %c0_196], %472 {strides = array<i32>} : memref<1x12x8x128xf32, #tpu.memory_space<vmem>>, vector<1x1x8x128xf32>,
    return
  }
  func.func @transform_0(%arg0: i32, %arg1: i32) -> (i32, i32) {
    %c1_i32 = arith.constant 1 : i32
    %0 = arith.muli %arg0, %c1_i32 : i32
    %1 = arith.addi %0, %arg1 : i32
    %c0_i32 = arith.constant 0 : i32
    %2 = arith.minsi %1, %c0_i32 : i32
    %c0_i32_0 = arith.constant 0 : i32
    %c0_i32_1 = arith.constant 0 : i32
    return %2, %c0_i32_0 : i32, i32
  }
  func.func @transform_1(%arg0: i32, %arg1: i32) -> (i32, i32) {
    %c1_i32 = arith.constant 1 : i32
    %0 = arith.muli %arg0, %c1_i32 : i32
    %1 = arith.addi %0, %arg1 : i32
    %c0_i32 = arith.constant 0 : i32
    %2 = arith.minsi %1, %c0_i32 : i32
    %c0_i32_0 = arith.constant 0 : i32
    %c0_i32_1 = arith.constant 0 : i32
    return %2, %c0_i32_0 : i32, i32
  }
  func.func @transform_2(%arg0: i32, %arg1: i32) -> (i32, i32) {
    %c1_i32 = arith.constant 1 : i32
    %0 = arith.muli %arg0, %c1_i32 : i32
    %1 = arith.addi %0, %arg1 : i32
    %c0_i32 = arith.constant 0 : i32
    %2 = arith.minsi %1, %c0_i32 : i32
    %c0_i32_0 = arith.constant 0 : i32
    %c0_i32_1 = arith.constant 0 : i32
    return %2, %c0_i32_0 : i32, i32
  }
  func.func @transform_3(%arg0: i32, %arg1: i32) -> (i32, i32) {
    %c1_i32 = arith.constant 1 : i32
    %0 = arith.muli %arg0, %c1_i32 : i32
    %1 = arith.addi %0, %arg1 : i32
    %c0_i32 = arith.constant 0 : i32
    %2 = arith.minsi %1, %c0_i32 : i32
    %c0_i32_0 = arith.constant 0 : i32
    %c0_i32_1 = arith.constant 0 : i32
    return %2, %c0_i32_0 : i32, i32
  }
  func.func @transform_4(%arg0: i32, %arg1: i32) -> (i32, i32) {
    %c1_i32 = arith.constant 1 : i32
    %0 = arith.muli %arg0, %c1_i32 : i32
    %1 = arith.addi %0, %arg1 : i32
    %c0_i32 = arith.constant 0 : i32
    %2 = arith.minsi %1, %c0_i32 : i32
    %c0_i32_0 = arith.constant 0 : i32
    %c0_i32_1 = arith.constant 0 : i32
    return %2, %c0_i32_0 : i32, i32
  }
  func.func @transform_5(%arg0: i32, %arg1: i32) -> (i32, i32) {
    %c1_i32 = arith.constant 1 : i32
    %0 = arith.muli %arg0, %c1_i32 : i32
    %1 = arith.addi %0, %arg1 : i32
    %c0_i32 = arith.constant 0 : i32
    %2 = arith.minsi %1, %c0_i32 : i32
    %c0_i32_0 = arith.constant 0 : i32
    %c0_i32_1 = arith.constant 0 : i32
    return %2, %c0_i32_0 : i32, i32
  }
  func.func @transform_6(%arg0: i32, %arg1: i32) -> (i32, i32, i32, i32) {
    %c0_i32 = arith.constant 0 : i32
    %c0_i32_0 = arith.constant 0 : i32
    %c0_i32_1 = arith.constant 0 : i32
    %c0_i32_2 = arith.constant 0 : i32
    return %arg0, %c0_i32, %c0_i32_0, %c0_i32_1 : i32, i32, i32, i32
  }
}

</mosaic_0001>

<llo_original>
// kernel: tpu_custom_call.1
$region0: #{tpu_custom_call.1}
  #allocation0 [shape = 'u32[]', space=smem, size = 0x4, offset = 0x4, fixed_abs, tag = 'smem constant byte address 0x4 - core index']
  #allocation1 [shape = 'u32[144,128]{1,0:T(1,128)}', space=vmem, size = 0x12000, scoped, tag = 'internal scratch']
  %s0 = inlined_call_operand.hbm [shape: f32[34,128], index: 0, kind: input, shape index: {}]
  %s1 = inlined_call_operand.hbm [shape: f32[34,128], index: 1, kind: input, shape index: {}]
  %s2 = inlined_call_operand.hbm [shape: bf16[34,128], index: 2, kind: input, shape index: {}]
  %s3 = inlined_call_operand.hbm [shape: bf16[34,128], index: 3, kind: input, shape index: {}]
  %s4 = inlined_call_operand.hbm [shape: f32[34,128], index: 4, kind: input, shape index: {}]
  %s5 = inlined_call_operand.hbm [shape: f32[34,128], index: 5, kind: input, shape index: {}]
  %s6 = inlined_call_operand.hbm [shape: f32[1,12,8,128], index: 6, kind: output, shape index: {}]
  %s7 = sld [smem:[#allocation0]]
  $region62: #{tpu_custom_call.1} parent=0
    _
  %s9 = ssub.s32 1, %s7
  %s10 = scalar_select 0, %s9, %s7
  $region1: #{tpu_custom_call.1} parent=0
    #allocation2 [shape = 'u8[24576]{0}', space=vmem, size = 0x6000, scoped, tag = 'input window, operand 0, single buffered']
    #allocation3 [shape = 's32[1]{0}', space=sflag, size = 0x4, scoped, tag = 'scoped memory for tpu_custom_call.1']
    #allocation4 [shape = 's32[1]{0}', space=sflag, size = 0x4, scoped, tag = 'scoped memory for tpu_custom_call.1']
    #allocation5 [shape = 'u8[24576]{0}', space=vmem, size = 0x6000, scoped, tag = 'input window, operand 1, single buffered']
    #allocation6 [shape = 's32[1]{0}', space=sflag, size = 0x4, scoped, tag = 'scoped memory for tpu_custom_call.1']
    #allocation7 [shape = 'u8[12288]{0}', space=vmem, size = 0x3000, scoped, tag = 'input window, operand 2, single buffered']
    #allocation8 [shape = 'u8[12288]{0}', space=vmem, size = 0x3000, scoped, tag = 'input window, operand 3, single buffered']
    #allocation9 [shape = 's32[1]{0}', space=sflag, size = 0x4, scoped, tag = 'scoped memory for tpu_custom_call.1']
    #allocation10 [shape = 'u8[24576]{0}', space=vmem, size = 0x6000, scoped, tag = 'input window, operand 4, single buffered']
    #allocation11 [shape = 'u8[24576]{0}', space=vmem, size = 0x6000, scoped, tag = 'input window, operand 5, single buffered']
    #allocation12 [shape = 's32[1]{0}', space=sflag, size = 0x4, scoped, tag = 'scoped memory for tpu_custom_call.1']
    #allocation13 [shape = 'u8[49152]{0}', space=vmem, size = 0xc000, scoped, tag = 'output window, operand 0, single buffered']
    %11 = vsyncpa [#allocation3], 0
    %12 = vsyncpa [#allocation6], 0
    %13 = vsyncpa [#allocation9], 0
    %14 = vsyncpa [#allocation12], 0
    %15 = vsyncpa [#allocation4], 0
    // Predicated region
    $region2: #{tpu_custom_call.1} parent=1 // pred_check
      _
    $region3: #{tpu_custom_call.1} parent=1 // pred_check_branch
      %17 = sbr.rel (0) target = $region5
    $region4: #{tpu_custom_call.1} parent=1 // pred_region
      %s18 = sadd.s32 0, 0
      %p19 = scmp.lt.s32.totalorder %s18, 0
      %s20 = scalar_select %p19, %s18, 0
      %s21 = smul.u32 6, %s20
      %s22 = ssub.s32 5, %s21
      %s23 = smul.u32 128, %s22
      %s25 = ssub.s32 768, %s23
      %26 = vsyncadd [#allocation3], %s25
      %p27 = scmp.ne.s32.totalorder 0, %s23
      %s28 = smul.addr %s21, 128
      %s29 = scalar_lea.hbm %s0, %s28
      %s30 = smul.u32 8, %s22
      %s31 = sshll.u32 [#allocation2], 4
      %s32 = int_to_ptr.vmem [resolvable:$true] %s31
      %s33 = sshll.u32 %s30, 4
      %37 = dma.hbm_to_vmem [thread:$0]  (%p27), %s29, %s33, %s32, [#allocation3], 128, 128, 8
    $region5: #{tpu_custom_call.1} parent=1 // pred_fallthru
      _
    // Predicated region
    $region6: #{tpu_custom_call.1} parent=1 // pred_check
      _
    $region7: #{tpu_custom_call.1} parent=1 // pred_check_branch
      %39 = sbr.rel (0) target = $region9
    $region8: #{tpu_custom_call.1} parent=1 // pred_region
      %s40 = sadd.s32 0, 0
      %p41 = scmp.lt.s32.totalorder %s40, 0
      %s42 = scalar_select %p41, %s40, 0
      %s43 = smul.u32 6, %s42
      %s44 = ssub.s32 5, %s43
      %s45 = smul.u32 128, %s44
      %s47 = ssub.s32 768, %s45
      %48 = vsyncadd [#allocation6], %s47
      %p49 = scmp.ne.s32.totalorder 0, %s45
      %s50 = smul.addr %s43, 128
      %s51 = scalar_lea.hbm %s1, %s50
      %s52 = smul.u32 8, %s44
      %s53 = sshll.u32 [#allocation5], 4
      %s54 = int_to_ptr.vmem [resolvable:$true] %s53
      %s55 = sshll.u32 %s52, 4
      %59 = dma.hbm_to_vmem [thread:$0]  (%p49), %s51, %s55, %s54, [#allocation6], 128, 128, 8
    $region9: #{tpu_custom_call.1} parent=1 // pred_fallthru
      _
    // Predicated region
    $region10: #{tpu_custom_call.1} parent=1 // pred_check
      _
    $region11: #{tpu_custom_call.1} parent=1 // pred_check_branch
      %61 = sbr.rel (0) target = $region13
    $region12: #{tpu_custom_call.1} parent=1 // pred_region
      %s62 = sadd.s32 0, 0
      %p63 = scmp.lt.s32.totalorder %s62, 0
      %s64 = scalar_select %p63, %s62, 0
      %s65 = smul.u32 6, %s64
      %s66 = ssub.s32 5, %s65
      %s67 = smul.u32 64, %s66
      %s69 = ssub.s32 384, %s67
      %70 = vsyncadd [#allocation6], %s69
      %p71 = scmp.ne.s32.totalorder 0, %s67
      %s72 = smul.addr %s65, 64
      %s73 = scalar_lea.hbm %s2, %s72
      %s74 = smul.u32 4, %s66
      %s75 = sshll.u32 [#allocation7], 4
      %s76 = int_to_ptr.vmem [resolvable:$true] %s75
      %s77 = sshll.u32 %s74, 4
      %81 = dma.hbm_to_vmem [thread:$0]  (%p71), %s73, %s77, %s76, [#allocation6], 64, 64, 4
    $region13: #{tpu_custom_call.1} parent=1 // pred_fallthru
      _
    // Predicated region
    $region14: #{tpu_custom_call.1} parent=1 // pred_check
      _
    $region15: #{tpu_custom_call.1} parent=1 // pred_check_branch
      %83 = sbr.rel (0) target = $region17
    $region16: #{tpu_custom_call.1} parent=1 // pred_region
      %s84 = sadd.s32 0, 0
      %p85 = scmp.lt.s32.totalorder %s84, 0
      %s86 = scalar_select %p85, %s84, 0
      %s87 = smul.u32 6, %s86
      %s88 = ssub.s32 5, %s87
      %s89 = smul.u32 64, %s88
      %s91 = ssub.s32 384, %s89
      %92 = vsyncadd [#allocation9], %s91
      %p93 = scmp.ne.s32.totalorder 0, %s89
      %s94 = smul.addr %s87, 64
      %s95 = scalar_lea.hbm %s3, %s94
      %s96 = smul.u32 4, %s88
      %s97 = sshll.u32 [#allocation8], 4
      %s98 = int_to_ptr.vmem [resolvable:$true] %s97
      %s99 = sshll.u32 %s96, 4
      %103 = dma.hbm_to_vmem [thread:$0]  (%p93), %s95, %s99, %s98, [#allocation9], 64, 64, 4
    $region17: #{tpu_custom_call.1} parent=1 // pred_fallthru
      _
    // Predicated region
    $region18: #{tpu_custom_call.1} parent=1 // pred_check
      _
    $region19: #{tpu_custom_call.1} parent=1 // pred_check_branch
      %105 = sbr.rel (0) target = $region21
    $region20: #{tpu_custom_call.1} parent=1 // pred_region
      %s106 = sadd.s32 0, 0
      %p107 = scmp.lt.s32.totalorder %s106, 0
      %s108 = scalar_select %p107, %s106, 0
      %s109 = smul.u32 6, %s108
      %s110 = ssub.s32 5, %s109
      %s111 = smul.u32 128, %s110
      %s113 = ssub.s32 768, %s111
      %114 = vsyncadd [#allocation9], %s113
      %p115 = scmp.ne.s32.totalorder 0, %s111
      %s116 = smul.addr %s109, 128
      %s117 = scalar_lea.hbm %s4, %s116
      %s118 = smul.u32 8, %s110
      %s119 = sshll.u32 [#allocation10], 4
      %s120 = int_to_ptr.vmem [resolvable:$true] %s119
      %s121 = sshll.u32 %s118, 4
      %125 = dma.hbm_to_vmem [thread:$0]  (%p115), %s117, %s121, %s120, [#allocation9], 128, 128, 8
    $region21: #{tpu_custom_call.1} parent=1 // pred_fallthru
      _
    // Predicated region
    $region22: #{tpu_custom_call.1} parent=1 // pred_check
      _
    $region23: #{tpu_custom_call.1} parent=1 // pred_check_branch
      %127 = sbr.rel (0) target = $region25
    $region24: #{tpu_custom_call.1} parent=1 // pred_region
      %s128 = sadd.s32 0, 0
      %p129 = scmp.lt.s32.totalorder %s128, 0
      %s130 = scalar_select %p129, %s128, 0
      %s131 = smul.u32 6, %s130
      %s132 = ssub.s32 5, %s131
      %s133 = smul.u32 128, %s132
      %s135 = ssub.s32 768, %s133
      %136 = vsyncadd [#allocation12], %s135
      %p137 = scmp.ne.s32.totalorder 0, %s133
      %s138 = smul.addr %s131, 128
      %s139 = scalar_lea.hbm %s5, %s138
      %s140 = smul.u32 8, %s132
      %s141 = sshll.u32 [#allocation11], 4
      %s142 = int_to_ptr.vmem [resolvable:$true] %s141
      %s143 = sshll.u32 %s140, 4
      %147 = dma.hbm_to_vmem [thread:$0]  (%p137), %s139, %s143, %s142, [#allocation12], 128, 128, 8
    $region25: #{tpu_custom_call.1} parent=1 // pred_fallthru
      _
    // Predicated region
    $region26: #{tpu_custom_call.1} parent=1 // pred_check
      _
    $region27: #{tpu_custom_call.1} parent=1 // pred_check_branch
      %149 = sbr.rel (0) target = $region29
    $region28: #{tpu_custom_call.1} parent=1 // pred_region
      %150 = dma.done [#allocation3], 768
    $region29: #{tpu_custom_call.1} parent=1 // pred_fallthru
      _
    // Predicated region
    $region30: #{tpu_custom_call.1} parent=1 // pred_check
      _
    $region31: #{tpu_custom_call.1} parent=1 // pred_check_branch
      %152 = sbr.rel (0) target = $region33
    $region32: #{tpu_custom_call.1} parent=1 // pred_region
      %153 = dma.done [#allocation6], 768
    $region33: #{tpu_custom_call.1} parent=1 // pred_fallthru
      _
    // Predicated region
    $region34: #{tpu_custom_call.1} parent=1 // pred_check
      _
    $region35: #{tpu_custom_call.1} parent=1 // pred_check_branch
      %155 = sbr.rel (0) target = $region37
    $region36: #{tpu_custom_call.1} parent=1 // pred_region
      %156 = dma.done [#allocation6], 384
    $region37: #{tpu_custom_call.1} parent=1 // pred_fallthru
      _
    // Predicated region
    $region38: #{tpu_custom_call.1} parent=1 // pred_check
      _
    $region39: #{tpu_custom_call.1} parent=1 // pred_check_branch
      %158 = sbr.rel (0) target = $region41
    $region40: #{tpu_custom_call.1} parent=1 // pred_region
      %159 = dma.done [#allocation9], 384
    $region41: #{tpu_custom_call.1} parent=1 // pred_fallthru
      _
    // Predicated region
    $region42: #{tpu_custom_call.1} parent=1 // pred_check
      _
    $region43: #{tpu_custom_call.1} parent=1 // pred_check_branch
      %161 = sbr.rel (0) target = $region45
    $region44: #{tpu_custom_call.1} parent=1 // pred_region
      %162 = dma.done [#allocation9], 768
    $region45: #{tpu_custom_call.1} parent=1 // pred_fallthru
      _
    // Predicated region
    $region46: #{tpu_custom_call.1} parent=1 // pred_check
      _
    $region47: #{tpu_custom_call.1} parent=1 // pred_check_branch
      %164 = sbr.rel (0) target = $region49
    $region48: #{tpu_custom_call.1} parent=1 // pred_region
      %165 = dma.done [#allocation12], 768
    $region49: #{tpu_custom_call.1} parent=1 // pred_fallthru
      _
    %s166 = sadd.s32 0, 0
    %p167 = scmp.lt.s32.totalorder %s166, 0
    %s168 = scalar_select %p167, %s166, 0
    %s169 = smul.u32 6, %s168
    %s170 = ssub.s32 5, %s169
    %s171 = smul.u32 128, %s170
    %s172 = sadd.s32 0, 0
    %p173 = scmp.lt.s32.totalorder %s172, 0
    %s174 = scalar_select %p173, %s172, 0
    %s175 = smul.u32 6, %s174
    %s176 = ssub.s32 5, %s175
    %s177 = smul.u32 128, %s176
    %s178 = sadd.s32 0, 0
    %p179 = scmp.lt.s32.totalorder %s178, 0
    %s180 = scalar_select %p179, %s178, 0
    %s181 = smul.u32 6, %s180
    %s182 = ssub.s32 5, %s181
    %s183 = smul.u32 64, %s182
    %s184 = sadd.s32 0, 0
    %p185 = scmp.lt.s32.totalorder %s184, 0
    %s186 = scalar_select %p185, %s184, 0
    %s187 = smul.u32 6, %s186
    %s188 = ssub.s32 5, %s187
    %s189 = smul.u32 64, %s188
    %s190 = sadd.s32 0, 0
    %p191 = scmp.lt.s32.totalorder %s190, 0
    %s192 = scalar_select %p191, %s190, 0
    %s193 = smul.u32 6, %s192
    %s194 = ssub.s32 5, %s193
    %s195 = smul.u32 128, %s194
    %s196 = sadd.s32 0, 0
    %p197 = scmp.lt.s32.totalorder %s196, 0
    %s198 = scalar_select %p197, %s196, 0
    %s199 = smul.u32 6, %s198
    %s200 = ssub.s32 5, %s199
    %s201 = smul.u32 128, %s200
    %p202 = scmp.eq.s32.totalorder 0, 0
    // Predicated region
    $region50: #{tpu_custom_call.1} parent=1 // pred_check
      %p203 = pneg %p202
    $region51: #{tpu_custom_call.1} parent=1 // pred_check_branch
      %205 = sbr.rel (%p203) target = $region53
    $region52: #{tpu_custom_call.1} parent=1 // pred_region
      %206 = vst [vmem:[#allocation13] sm:$0xff] 0.0
      %207 = vst [vmem:[#allocation13 + $0x8] sm:$0xff] 0.0
      %208 = vst [vmem:[#allocation13 + $0x10] sm:$0xff] 0.0
      %209 = vst [vmem:[#allocation13 + $0x18] sm:$0xff] 0.0
      %210 = vst [vmem:[#allocation13 + $0x20] sm:$0xff] 0.0
      %211 = vst [vmem:[#allocation13 + $0x28] sm:$0xff] 0.0
      %212 = vst [vmem:[#allocation13 + $0x30] sm:$0xff] 0.0
      %213 = vst [vmem:[#allocation13 + $0x38] sm:$0xff] 0.0
      %214 = vst [vmem:[#allocation13 + $0x40] sm:$0xff] 0.0
      %215 = vst [vmem:[#allocation13 + $0x48] sm:$0xff] 0.0
      %216 = vst [vmem:[#allocation13 + $0x50] sm:$0xff] 0.0
      %217 = vst [vmem:[#allocation13 + $0x58] sm:$0xff] 0.0
    $region53: #{tpu_custom_call.1} parent=1 // pred_fallthru
      _
    %s218 = sadd.s32 0, 0
    %s219 = smul.u32 %s218, 48
    %s220 = ssub.s32 34, %s219
    %v221 = vlaneseq
    %v222 = vshrl.u32 %v221, 7
    %v223 = vadd.s32 %v222, 8
    %v224 = vstv 0
    %v225 = vadd.s32 %v224, %v222
    %v226 = vadd.s32 %v224, %v223
    %v227 = vstv %s220
    %vm228 = vcmp.lt.s32.totalorder %v225, %v227
    %vm229 = vcmp.lt.s32.totalorder %v226, %v227
    %v230 = vld [vmem:[#allocation2] sm:$0xff]
    %v231 = vld [vmem:[#allocation2 + $0x8] sm:$0xff]
    %v232 = vld [vmem:[#allocation5] sm:$0xff]
    %v233 = vld [vmem:[#allocation5 + $0x8] sm:$0xff]
    %v234 = vld [vmem:[#allocation7] sm:$0xf]
    %v235 = vld [vmem:[#allocation7 + $0x4] sm:$0xf]
    %v236 = vunpack.c.l.bf16 %v234
    %v237 = vunpack.c.l.bf16 %v235
    %v238 = vld [vmem:[#allocation8] sm:$0xf]
    %v239 = vld [vmem:[#allocation8 + $0x4] sm:$0xf]
    %v240 = vunpack.c.l.bf16 %v238
    %v241 = vunpack.c.l.bf16 %v239
    %v242 = vld [vmem:[#allocation10] sm:$0xff]
    %v243 = vld [vmem:[#allocation10 + $0x8] sm:$0xff]
    %v244 = vld [vmem:[#allocation11] sm:$0xff]
    %v245 = vld [vmem:[#allocation11 + $0x8] sm:$0xff]
    %vm246 = vcmp.ge.f32.partialorder %v232, 1.0
    %vm247 = vcmp.ge.f32.partialorder %v233, 1.0
    %vm248 = vmand %vm228, %vm246
    %vm249 = vmand %vm229, %vm247
    %vm250 = vcmp.le.f32.partialorder %v232, 192.0
    %vm251 = vcmp.le.f32.partialorder %v233, 192.0
    %vm252 = vmand %vm248, %vm250
    %vm253 = vmand %vm249, %vm251
    %v254 = vsub.f32 %v230, %v232
    %v255 = vsub.f32 %v231, %v233
    %v256 = vand.u32 2147483647, %v254
    %v257 = vand.u32 2147483647, %v255
    %vm258 = vcmp.lt.f32.partialorder %v256, 1.0
    %vm259 = vcmp.lt.f32.partialorder %v257, 1.0
    %v260 = vmul.f32 %v254, 0.5
    %v261 = vmul.f32 %v255, 0.5
    %v262 = vmul.f32 %v260, %v254
    %v263 = vmul.f32 %v261, %v255
    %v264 = vsub.f32 %v256, 0.5
    %v265 = vsub.f32 %v257, 0.5
    %v266 = vsel %vm258, %v262, %v264
    %v267 = vsel %vm259, %v263, %v265
    %vm268 = vcmp.gt.f32.partialorder %v244, 0.0
    %vm269 = vcmp.gt.f32.partialorder %v245, 0.0
    %vm270 = vmand %vm252, %vm268
    %vm271 = vmand %vm253, %vm269
    %v272 = vsub.f32 %v242, %v232
    %v273 = vsub.f32 %v243, %v233
    %v274 = vand.u32 2147483647, %v272
    %v275 = vand.u32 2147483647, %v273
    %v276 = vsub.f32 %v244, %v232
    %v277 = vsub.f32 %v245, %v233
    %v278 = vand.u32 2147483647, %v276
    %v279 = vand.u32 2147483647, %v277
    %v280 = vsub.f32 %v274, %v278
    %v281 = vsub.f32 %v275, %v279
    %vm282 = vcmp.lt.f32.partialorder %v280, -1.0
    %vm283 = vcmp.lt.f32.partialorder %v281, -1.0
    %vm284 = vmand %vm270, %vm282
    %vm285 = vmand %vm271, %vm283
    %vm286 = vcmp.gt.f32.partialorder %v280, 1.0
    %vm287 = vcmp.gt.f32.partialorder %v281, 1.0
    %vm288 = vmand %vm270, %vm286
    %vm289 = vmand %vm271, %vm287
    %v290 = vand.u32 2147483647, %v280
    %v291 = vand.u32 2147483647, %v281
    %vm292 = vcmp.le.f32.partialorder %v290, 1.0
    %vm293 = vcmp.le.f32.partialorder %v291, 1.0
    %vm294 = vmand %vm270, %vm292
    %vm295 = vmand %vm271, %vm293
    %vm296 = vcmp.lt.f32.partialorder %v280, -5.0
    %vm297 = vcmp.lt.f32.partialorder %v281, -5.0
    %vm298 = vmand %vm270, %vm296
    %vm299 = vmand %vm271, %vm297
    %vm300 = vcmp.gt.f32.partialorder %v280, 5.0
    %vm301 = vcmp.gt.f32.partialorder %v281, 5.0
    %vm302 = vmand %vm270, %vm300
    %vm303 = vmand %vm271, %vm301
    %v304 = vsub.f32 1.0, %v236
    %v305 = vsub.f32 1.0, %v237
    %v306 = vsub.f32 1.0, %v240
    %v307 = vsub.f32 1.0, %v241
    %v308 = vsel %vm252, %v266, 0.0
    %v309 = vsel %vm253, %v267, 0.0
    %v310 = vadd.f32 %v308, %v309
    %v311 = vadd.f32 %v310, 0.0
    %v312 = vsel %vm252, 1, 0
    %v313 = vsel %vm253, 1, 0
    %v314 = vcvt.s32.f32 %v312
    %v315 = vcvt.s32.f32 %v313
    %v316 = vadd.f32 %v314, %v315
    %v317 = vadd.f32 %v316, 0.0
    %v318 = vsel %vm284, %v236, 0.0
    %v319 = vsel %vm285, %v237, 0.0
    %v320 = vadd.f32 %v318, %v319
    %v321 = vadd.f32 %v320, 0.0
    %v322 = vsel %vm284, 1, 0
    %v323 = vsel %vm285, 1, 0
    %v324 = vcvt.s32.f32 %v322
    %v325 = vcvt.s32.f32 %v323
    %v326 = vadd.f32 %v324, %v325
    %v327 = vadd.f32 %v326, 0.0
    %v328 = vsel %vm288, %v304, 0.0
    %v329 = vsel %vm289, %v305, 0.0
    %v330 = vadd.f32 %v328, %v329
    %v331 = vadd.f32 %v330, 0.0
    %v332 = vsel %vm288, 1, 0
    %v333 = vsel %vm289, 1, 0
    %v334 = vcvt.s32.f32 %v332
    %v335 = vcvt.s32.f32 %v333
    %v336 = vadd.f32 %v334, %v335
    %v337 = vadd.f32 %v336, 0.0
    %v338 = vsub.f32 %v304, 0.5
    %v339 = vsub.f32 %v305, 0.5
    %v340 = vand.u32 2147483647, %v338
    %v341 = vand.u32 2147483647, %v339
    %v342 = vsel %vm294, %v340, 0.0
    %v343 = vsel %vm295, %v341, 0.0
    %v344 = vadd.f32 %v342, %v343
    %v345 = vadd.f32 %v344, 0.0
    %v346 = vsel %vm294, 1, 0
    %v347 = vsel %vm295, 1, 0
    %v348 = vcvt.s32.f32 %v346
    %v349 = vcvt.s32.f32 %v347
    %v350 = vadd.f32 %v348, %v349
    %v351 = vadd.f32 %v350, 0.0
    %v352 = vsel %vm298, %v240, 0.0
    %v353 = vsel %vm299, %v241, 0.0
    %v354 = vadd.f32 %v352, %v353
    %v355 = vadd.f32 %v354, 0.0
    %v356 = vsel %vm298, 1, 0
    %v357 = vsel %vm299, 1, 0
    %v358 = vcvt.s32.f32 %v356
    %v359 = vcvt.s32.f32 %v357
    %v360 = vadd.f32 %v358, %v359
    %v361 = vadd.f32 %v360, 0.0
    %v362 = vsel %vm302, %v306, 0.0
    %v363 = vsel %vm303, %v307, 0.0
    %v364 = vadd.f32 %v362, %v363
    %v365 = vadd.f32 %v364, 0.0
    %v366 = vsel %vm302, 1, 0
    %v367 = vsel %vm303, 1, 0
    %v368 = vcvt.s32.f32 %v366
    %v369 = vcvt.s32.f32 %v367
    %v370 = vadd.f32 %v368, %v369
    %v371 = vadd.f32 %v370, 0.0
    %v372 = vstv 16
    %v373 = vadd.s32 %v372, %v222
    %v374 = vadd.s32 %v372, %v223
    %vm375 = vcmp.lt.s32.totalorder %v373, %v227
    %vm376 = vcmp.lt.s32.totalorder %v374, %v227
    %s377 = scalar_lea.vmem [#allocation2], 16
    %v378 = vld [vmem:[%s377] sm:$0xff]
    %v379 = vld [vmem:[%s377 + $0x8] sm:$0xff]
    %s380 = scalar_lea.vmem [#allocation5], 16
    %v381 = vld [vmem:[%s380] sm:$0xff]
    %v382 = vld [vmem:[%s380 + $0x8] sm:$0xff]
    %s383 = scalar_lea.vmem [#allocation7], 8
    %v384 = vld [vmem:[%s383] sm:$0xf]
    %v385 = vld [vmem:[%s383 + $0x4] sm:$0xf]
    %v386 = vunpack.c.l.bf16 %v384
    %v387 = vunpack.c.l.bf16 %v385
    %s388 = scalar_lea.vmem [#allocation8], 8
    %v389 = vld [vmem:[%s388] sm:$0xf]
    %v390 = vld [vmem:[%s388 + $0x4] sm:$0xf]
    %v391 = vunpack.c.l.bf16 %v389
    %v392 = vunpack.c.l.bf16 %v390
    %s393 = scalar_lea.vmem [#allocation10], 16
    %v394 = vld [vmem:[%s393] sm:$0xff]
    %v395 = vld [vmem:[%s393 + $0x8] sm:$0xff]
    %s396 = scalar_lea.vmem [#allocation11], 16
    %v397 = vld [vmem:[%s396] sm:$0xff]
    %v398 = vld [vmem:[%s396 + $0x8] sm:$0xff]
    %vm399 = vcmp.ge.f32.partialorder %v381, 1.0
    %vm400 = vcmp.ge.f32.partialorder %v382, 1.0
    %vm401 = vmand %vm375, %vm399
    %vm402 = vmand %vm376, %vm400
    %vm403 = vcmp.le.f32.partialorder %v381, 192.0
    %vm404 = vcmp.le.f32.partialorder %v382, 192.0
    %vm405 = vmand %vm401, %vm403
    %vm406 = vmand %vm402, %vm404
    %v407 = vsub.f32 %v378, %v381
    %v408 = vsub.f32 %v379, %v382
    %v409 = vand.u32 2147483647, %v407
    %v410 = vand.u32 2147483647, %v408
    %vm411 = vcmp.lt.f32.partialorder %v409, 1.0
    %vm412 = vcmp.lt.f32.partialorder %v410, 1.0
    %v413 = vmul.f32 %v407, 0.5
    %v414 = vmul.f32 %v408, 0.5
    %v415 = vmul.f32 %v413, %v407
    %v416 = vmul.f32 %v414, %v408
    %v417 = vsub.f32 %v409, 0.5
    %v418 = vsub.f32 %v410, 0.5
    %v419 = vsel %vm411, %v415, %v417
    %v420 = vsel %vm412, %v416, %v418
    %vm421 = vcmp.gt.f32.partialorder %v397, 0.0
    %vm422 = vcmp.gt.f32.partialorder %v398, 0.0
    %vm423 = vmand %vm405, %vm421
    %vm424 = vmand %vm406, %vm422
    %v425 = vsub.f32 %v394, %v381
    %v426 = vsub.f32 %v395, %v382
    %v427 = vand.u32 2147483647, %v425
    %v428 = vand.u32 2147483647, %v426
    %v429 = vsub.f32 %v397, %v381
    %v430 = vsub.f32 %v398, %v382
    %v431 = vand.u32 2147483647, %v429
    %v432 = vand.u32 2147483647, %v430
    %v433 = vsub.f32 %v427, %v431
    %v434 = vsub.f32 %v428, %v432
    %vm435 = vcmp.lt.f32.partialorder %v433, -1.0
    %vm436 = vcmp.lt.f32.partialorder %v434, -1.0
    %vm437 = vmand %vm423, %vm435
    %vm438 = vmand %vm424, %vm436
    %vm439 = vcmp.gt.f32.partialorder %v433, 1.0
    %vm440 = vcmp.gt.f32.partialorder %v434, 1.0
    %vm441 = vmand %vm423, %vm439
    %vm442 = vmand %vm424, %vm440
    %v443 = vand.u32 2147483647, %v433
    %v444 = vand.u32 2147483647, %v434
    %vm445 = vcmp.le.f32.partialorder %v443, 1.0
    %vm446 = vcmp.le.f32.partialorder %v444, 1.0
    %vm447 = vmand %vm423, %vm445
    %vm448 = vmand %vm424, %vm446
    %vm449 = vcmp.lt.f32.partialorder %v433, -5.0
    %vm450 = vcmp.lt.f32.partialorder %v434, -5.0
    %vm451 = vmand %vm423, %vm449
    %vm452 = vmand %vm424, %vm450
    %vm453 = vcmp.gt.f32.partialorder %v433, 5.0
    %vm454 = vcmp.gt.f32.partialorder %v434, 5.0
    %vm455 = vmand %vm423, %vm453
    %vm456 = vmand %vm424, %vm454
    %v457 = vsub.f32 1.0, %v386
    %v458 = vsub.f32 1.0, %v387
    %v459 = vsub.f32 1.0, %v391
    %v460 = vsub.f32 1.0, %v392
    %v461 = vsel %vm405, %v419, 0.0
    %v462 = vsel %vm406, %v420, 0.0
    %v463 = vadd.f32 %v461, %v462
    %v464 = vadd.f32 %v311, %v463
    %v465 = vsel %vm405, 1, 0
    %v466 = vsel %vm406, 1, 0
    %v467 = vcvt.s32.f32 %v465
    %v468 = vcvt.s32.f32 %v466
    %v469 = vadd.f32 %v467, %v468
    %v470 = vadd.f32 %v317, %v469
    %v471 = vsel %vm437, %v386, 0.0
    %v472 = vsel %vm438, %v387, 0.0
    %v473 = vadd.f32 %v471, %v472
    %v474 = vadd.f32 %v321, %v473
    %v475 = vsel %vm437, 1, 0
    %v476 = vsel %vm438, 1, 0
    %v477 = vcvt.s32.f32 %v475
    %v478 = vcvt.s32.f32 %v476
    %v479 = vadd.f32 %v477, %v478
    %v480 = vadd.f32 %v327, %v479
    %v481 = vsel %vm441, %v457, 0.0
    %v482 = vsel %vm442, %v458, 0.0
    %v483 = vadd.f32 %v481, %v482
    %v484 = vadd.f32 %v331, %v483
    %v485 = vsel %vm441, 1, 0
    %v486 = vsel %vm442, 1, 0
    %v487 = vcvt.s32.f32 %v485
    %v488 = vcvt.s32.f32 %v486
    %v489 = vadd.f32 %v487, %v488
    %v490 = vadd.f32 %v337, %v489
    %v491 = vsub.f32 %v457, 0.5
    %v492 = vsub.f32 %v458, 0.5
    %v493 = vand.u32 2147483647, %v491
    %v494 = vand.u32 2147483647, %v492
    %v495 = vsel %vm447, %v493, 0.0
    %v496 = vsel %vm448, %v494, 0.0
    %v497 = vadd.f32 %v495, %v496
    %v498 = vadd.f32 %v345, %v497
    %v499 = vsel %vm447, 1, 0
    %v500 = vsel %vm448, 1, 0
    %v501 = vcvt.s32.f32 %v499
    %v502 = vcvt.s32.f32 %v500
    %v503 = vadd.f32 %v501, %v502
    %v504 = vadd.f32 %v351, %v503
    %v505 = vsel %vm451, %v391, 0.0
    %v506 = vsel %vm452, %v392, 0.0
    %v507 = vadd.f32 %v505, %v506
    %v508 = vadd.f32 %v355, %v507
    %v509 = vsel %vm451, 1, 0
    %v510 = vsel %vm452, 1, 0
    %v511 = vcvt.s32.f32 %v509
    %v512 = vcvt.s32.f32 %v510
    %v513 = vadd.f32 %v511, %v512
    %v514 = vadd.f32 %v361, %v513
    %v515 = vsel %vm455, %v459, 0.0
    %v516 = vsel %vm456, %v460, 0.0
    %v517 = vadd.f32 %v515, %v516
    %v518 = vadd.f32 %v365, %v517
    %v519 = vsel %vm455, 1, 0
    %v520 = vsel %vm456, 1, 0
    %v521 = vcvt.s32.f32 %v519
    %v522 = vcvt.s32.f32 %v520
    %v523 = vadd.f32 %v521, %v522
    %v524 = vadd.f32 %v371, %v523
    %v525 = vstv 32
    %v526 = vadd.s32 %v525, %v222
    %v527 = vadd.s32 %v525, %v223
    %vm528 = vcmp.lt.s32.totalorder %v526, %v227
    %vm529 = vcmp.lt.s32.totalorder %v527, %v227
    %s530 = scalar_lea.vmem [#allocation2], 32
    %v531 = vld [vmem:[%s530] sm:$0xff]
    %v532 = vld [vmem:[%s530 + $0x8] sm:$0xff]
    %s533 = scalar_lea.vmem [#allocation5], 32
    %v534 = vld [vmem:[%s533] sm:$0xff]
    %v535 = vld [vmem:[%s533 + $0x8] sm:$0xff]
    %s536 = scalar_lea.vmem [#allocation7], 16
    %v537 = vld [vmem:[%s536] sm:$0xf]
    %v538 = vld [vmem:[%s536 + $0x4] sm:$0xf]
    %v539 = vunpack.c.l.bf16 %v537
    %v540 = vunpack.c.l.bf16 %v538
    %s541 = scalar_lea.vmem [#allocation8], 16
    %v542 = vld [vmem:[%s541] sm:$0xf]
    %v543 = vld [vmem:[%s541 + $0x4] sm:$0xf]
    %v544 = vunpack.c.l.bf16 %v542
    %v545 = vunpack.c.l.bf16 %v543
    %s546 = scalar_lea.vmem [#allocation10], 32
    %v547 = vld [vmem:[%s546] sm:$0xff]
    %v548 = vld [vmem:[%s546 + $0x8] sm:$0xff]
    %s549 = scalar_lea.vmem [#allocation11], 32
    %v550 = vld [vmem:[%s549] sm:$0xff]
    %v551 = vld [vmem:[%s549 + $0x8] sm:$0xff]
    %vm552 = vcmp.ge.f32.partialorder %v534, 1.0
    %vm553 = vcmp.ge.f32.partialorder %v535, 1.0
    %vm554 = vmand %vm528, %vm552
    %vm555 = vmand %vm529, %vm553
    %vm556 = vcmp.le.f32.partialorder %v534, 192.0
    %vm557 = vcmp.le.f32.partialorder %v535, 192.0
    %vm558 = vmand %vm554, %vm556
    %vm559 = vmand %vm555, %vm557
    %v560 = vsub.f32 %v531, %v534
    %v561 = vsub.f32 %v532, %v535
    %v562 = vand.u32 2147483647, %v560
    %v563 = vand.u32 2147483647, %v561
    %vm564 = vcmp.lt.f32.partialorder %v562, 1.0
    %vm565 = vcmp.lt.f32.partialorder %v563, 1.0
    %v566 = vmul.f32 %v560, 0.5
    %v567 = vmul.f32 %v561, 0.5
    %v568 = vmul.f32 %v566, %v560
    %v569 = vmul.f32 %v567, %v561
    %v570 = vsub.f32 %v562, 0.5
    %v571 = vsub.f32 %v563, 0.5
    %v572 = vsel %vm564, %v568, %v570
    %v573 = vsel %vm565, %v569, %v571
    %vm574 = vcmp.gt.f32.partialorder %v550, 0.0
    %vm575 = vcmp.gt.f32.partialorder %v551, 0.0
    %vm576 = vmand %vm558, %vm574
    %vm577 = vmand %vm559, %vm575
    %v578 = vsub.f32 %v547, %v534
    %v579 = vsub.f32 %v548, %v535
    %v580 = vand.u32 2147483647, %v578
    %v581 = vand.u32 2147483647, %v579
    %v582 = vsub.f32 %v550, %v534
    %v583 = vsub.f32 %v551, %v535
    %v584 = vand.u32 2147483647, %v582
    %v585 = vand.u32 2147483647, %v583
    %v586 = vsub.f32 %v580, %v584
    %v587 = vsub.f32 %v581, %v585
    %vm588 = vcmp.lt.f32.partialorder %v586, -1.0
    %vm589 = vcmp.lt.f32.partialorder %v587, -1.0
    %vm590 = vmand %vm576, %vm588
    %vm591 = vmand %vm577, %vm589
    %vm592 = vcmp.gt.f32.partialorder %v586, 1.0
    %vm593 = vcmp.gt.f32.partialorder %v587, 1.0
    %vm594 = vmand %vm576, %vm592
    %vm595 = vmand %vm577, %vm593
    %v596 = vand.u32 2147483647, %v586
    %v597 = vand.u32 2147483647, %v587
    %vm598 = vcmp.le.f32.partialorder %v596, 1.0
    %vm599 = vcmp.le.f32.partialorder %v597, 1.0
    %vm600 = vmand %vm576, %vm598
    %vm601 = vmand %vm577, %vm599
    %vm602 = vcmp.lt.f32.partialorder %v586, -5.0
    %vm603 = vcmp.lt.f32.partialorder %v587, -5.0
    %vm604 = vmand %vm576, %vm602
    %vm605 = vmand %vm577, %vm603
    %vm606 = vcmp.gt.f32.partialorder %v586, 5.0
    %vm607 = vcmp.gt.f32.partialorder %v587, 5.0
    %vm608 = vmand %vm576, %vm606
    %vm609 = vmand %vm577, %vm607
    %v610 = vsub.f32 1.0, %v539
    %v611 = vsub.f32 1.0, %v540
    %v612 = vsub.f32 1.0, %v544
    %v613 = vsub.f32 1.0, %v545
    %v614 = vsel %vm558, %v572, 0.0
    %v615 = vsel %vm559, %v573, 0.0
    %v616 = vadd.f32 %v614, %v615
    %v617 = vadd.f32 %v464, %v616
    %v618 = vsel %vm558, 1, 0
    %v619 = vsel %vm559, 1, 0
    %v620 = vcvt.s32.f32 %v618
    %v621 = vcvt.s32.f32 %v619
    %v622 = vadd.f32 %v620, %v621
    %v623 = vadd.f32 %v470, %v622
    %v624 = vsel %vm590, %v539, 0.0
    %v625 = vsel %vm591, %v540, 0.0
    %v626 = vadd.f32 %v624, %v625
    %v627 = vadd.f32 %v474, %v626
    %v628 = vsel %vm590, 1, 0
    %v629 = vsel %vm591, 1, 0
    %v630 = vcvt.s32.f32 %v628
    %v631 = vcvt.s32.f32 %v629
    %v632 = vadd.f32 %v630, %v631
    %v633 = vadd.f32 %v480, %v632
    %v634 = vsel %vm594, %v610, 0.0
    %v635 = vsel %vm595, %v611, 0.0
    %v636 = vadd.f32 %v634, %v635
    %v637 = vadd.f32 %v484, %v636
    %v638 = vsel %vm594, 1, 0
    %v639 = vsel %vm595, 1, 0
    %v640 = vcvt.s32.f32 %v638
    %v641 = vcvt.s32.f32 %v639
    %v642 = vadd.f32 %v640, %v641
    %v643 = vadd.f32 %v490, %v642
    %v644 = vsub.f32 %v610, 0.5
    %v645 = vsub.f32 %v611, 0.5
    %v646 = vand.u32 2147483647, %v644
    %v647 = vand.u32 2147483647, %v645
    %v648 = vsel %vm600, %v646, 0.0
    %v649 = vsel %vm601, %v647, 0.0
    %v650 = vadd.f32 %v648, %v649
    %v651 = vadd.f32 %v498, %v650
    %v652 = vsel %vm600, 1, 0
    %v653 = vsel %vm601, 1, 0
    %v654 = vcvt.s32.f32 %v652
    %v655 = vcvt.s32.f32 %v653
    %v656 = vadd.f32 %v654, %v655
    %v657 = vadd.f32 %v504, %v656
    %v658 = vsel %vm604, %v544, 0.0
    %v659 = vsel %vm605, %v545, 0.0
    %v660 = vadd.f32 %v658, %v659
    %v661 = vadd.f32 %v508, %v660
    %v662 = vsel %vm604, 1, 0
    %v663 = vsel %vm605, 1, 0
    %v664 = vcvt.s32.f32 %v662
    %v665 = vcvt.s32.f32 %v663
    %v666 = vadd.f32 %v664, %v665
    %v667 = vadd.f32 %v514, %v666
    %v668 = vsel %vm608, %v612, 0.0
    %v669 = vsel %vm609, %v613, 0.0
    %v670 = vadd.f32 %v668, %v669
    %v671 = vadd.f32 %v518, %v670
    %v672 = vsel %vm608, 1, 0
    %v673 = vsel %vm609, 1, 0
    %v674 = vcvt.s32.f32 %v672
    %v675 = vcvt.s32.f32 %v673
    %v676 = vadd.f32 %v674, %v675
    %v677 = vadd.f32 %v524, %v676
    %v678 = vld [vmem:[#allocation13] sm:$0xff]
    %v679 = vadd.f32 %v678, %v617
    %680 = vst [vmem:[#allocation13] sm:$0xff] %v679
    %s681 = scalar_lea.vmem [#allocation13], 8
    %v682 = vld [vmem:[%s681] sm:$0xff]
    %v683 = vadd.f32 %v682, %v623
    %684 = vst [vmem:[%s681] sm:$0xff] %v683
    %s685 = scalar_lea.vmem [#allocation13], 16
    %v686 = vld [vmem:[%s685] sm:$0xff]
    %v687 = vadd.f32 %v686, %v627
    %688 = vst [vmem:[%s685] sm:$0xff] %v687
    %s689 = scalar_lea.vmem [#allocation13], 24
    %v690 = vld [vmem:[%s689] sm:$0xff]
    %v691 = vadd.f32 %v690, %v633
    %692 = vst [vmem:[%s689] sm:$0xff] %v691
    %s693 = scalar_lea.vmem [#allocation13], 32
    %v694 = vld [vmem:[%s693] sm:$0xff]
    %v695 = vadd.f32 %v694, %v637
    %696 = vst [vmem:[%s693] sm:$0xff] %v695
    %s697 = scalar_lea.vmem [#allocation13], 40
    %v698 = vld [vmem:[%s697] sm:$0xff]
    %v699 = vadd.f32 %v698, %v643
    %700 = vst [vmem:[%s697] sm:$0xff] %v699
    %s701 = scalar_lea.vmem [#allocation13], 48
    %v702 = vld [vmem:[%s701] sm:$0xff]
    %v703 = vadd.f32 %v702, %v651
    %704 = vst [vmem:[%s701] sm:$0xff] %v703
    %s705 = scalar_lea.vmem [#allocation13], 56
    %v706 = vld [vmem:[%s705] sm:$0xff]
    %v707 = vadd.f32 %v706, %v657
    %708 = vst [vmem:[%s705] sm:$0xff] %v707
    %s709 = scalar_lea.vmem [#allocation13], 64
    %v710 = vld [vmem:[%s709] sm:$0xff]
    %v711 = vadd.f32 %v710, %v661
    %712 = vst [vmem:[%s709] sm:$0xff] %v711
    %s713 = scalar_lea.vmem [#allocation13], 72
    %v714 = vld [vmem:[%s713] sm:$0xff]
    %v715 = vadd.f32 %v714, %v667
    %716 = vst [vmem:[%s713] sm:$0xff] %v715
    %s717 = scalar_lea.vmem [#allocation13], 80
    %v718 = vld [vmem:[%s717] sm:$0xff]
    %v719 = vadd.f32 %v718, %v671
    %720 = vst [vmem:[%s717] sm:$0xff] %v719
    %s721 = scalar_lea.vmem [#allocation13], 88
    %v722 = vld [vmem:[%s721] sm:$0xff]
    %v723 = vadd.f32 %v722, %v677
    %724 = vst [vmem:[%s721] sm:$0xff] %v723
    // Predicated region
    $region54: #{tpu_custom_call.1} parent=1 // pred_check
      _
    $region55: #{tpu_custom_call.1} parent=1 // pred_check_branch
      %726 = sbr.rel (0) target = $region57
    $region56: #{tpu_custom_call.1} parent=1 // pred_region
      %s728 = ssub.s32 1536, 1536
      %729 = vsyncadd [#allocation4], %s728
      %s730 = sshll.u32 [#allocation13], 4
      %s731 = int_to_ptr.vmem [resolvable:$true] %s730
      %736 = dma.vmem_to_hbm [thread:$0]  %s731, 1536, %s6, [#allocation4], 128, 128, 8
    $region57: #{tpu_custom_call.1} parent=1 // pred_fallthru
      _
    // Predicated region
    $region58: #{tpu_custom_call.1} parent=1 // pred_check
      _
    $region59: #{tpu_custom_call.1} parent=1 // pred_check_branch
      %738 = sbr.rel (0) target = $region61
    $region60: #{tpu_custom_call.1} parent=1 // pred_region
      %739 = dma.done [#allocation4], 1536
    $region61: #{tpu_custom_call.1} parent=1 // pred_fallthru
      _
    %740 = vsyncpa [#allocation3], 1
    %741 = vsyncpa [#allocation6], 1
    %742 = vsyncpa [#allocation9], 1
    %743 = vsyncpa [#allocation12], 1
    %744 = vsyncpa [#allocation4], 1

</llo_original>
